<compile_context>
chip_gen: v7x
topology: tpu7x:2x2x1
jax: 0.10.0
libtpu: 0.0.40
codegen_flags: <defaults>
</compile_context>

<pallas_src>
import functools
import math

import jax
import jax.numpy as jnp
from jax import lax
from jax.experimental import pallas as pl
from jax.experimental.pallas import tpu as pltpu


def _recip(x, refine=True):
    # EUP approximate reciprocal (+ optional single Newton step -> ~f32
    # accuracy); keeps the division off the saturated VALU slot.  Per review
    # item 10, refine=False saves 3 more VALU ops/elem and can be enabled once
    # validated against the reference tolerance.
    r = pl.reciprocal(x, approx=True)
    if refine:
        r = r * (2.0 - x * r)
    return r


def _knn_fit_kernel(params_ref, x1h_ref, x1l_ref, x2_ref, y_ref,
                    out_ref, acc_ref, *, refine_recip):
    kt = pl.program_id(1)
    nk = pl.num_programs(1)

    @pl.when(kt == 0)
    def _():
        acc_ref[...] = jnp.zeros_like(acc_ref)

    ck = params_ref[0]     # 1 + k
    pp = params_ref[1]     # (1 - j) * (1 + k)
    qq = params_ref[2]     # k * (1 - j)
    b2 = params_ref[3]     # 2 * j
    scale = params_ref[4]  # beta * (1 + j) / (2 * K)
    bias = params_ref[5]   # beta * (alpha + 0.5 * mean(Y))

    dims = (((0,), (0,)), ((), ()))
    # xc[k,b] = 2*(1 - WHDx[k,b]/norm_W): two bf16 MXU passes (hi + lo split of
    # the pre-scaled X1 operand) accumulating in f32 reproduce the f32
    # contraction to ~f32 accuracy; the c1/c2 affine corrections are already
    # folded in via the appended rows, so no broadcast adds hit the VALU slot.
    # (Both operands contract dim 0; if an XLU transpose becomes binding after
    # the VALU trims, swap the stationary operand but keep the lane-dense
    # (1, tb) output orientation.)
    xc = lax.dot_general(x2_ref[...], x1h_ref[...], dims,
                         preferred_element_type=jnp.float32)
    xc = xc + lax.dot_general(x2_ref[...], x1l_ref[...], dims,
                              preferred_element_type=jnp.float32)

    # Fused F(): with x = clip(xc/2, 0, 1) and D1 = (1+k) - 2kx >= 0:
    #   N1 = 2x - (1+k),  denom = (1-j)*D1 + 2j*|N1|,
    #   F  = 0.5 + ((1+j)/2) * N1 / denom.
    # The 0.5 and (1+j)/2 factors are folded into bias/scale, so only
    # g = N1/denom is computed per element: a single reciprocal (vs two).
    xc = jnp.clip(xc, 0.0, 2.0)
    n1 = xc - ck
    denom = (pp - qq * xc) + b2 * jnp.abs(n1)
    g = n1 * _recip(denom, refine_recip)

    # K-reduction of Y[k] * g[k,b] on the MXU (lane-dense (1, tb) result).
    acc_ref[...] += lax.dot_general(y_ref[...], g, (((1,), (0,)), ((), ())),
                                    preferred_element_type=jnp.float32)

    @pl.when(kt == nk - 1)
    def _():
        out_ref[...] = (scale * acc_ref[...] + bias).astype(out_ref.dtype)


def _vmem_bytes(de, tb, tk):
    bf16b, f32b = 2, 4
    return (2 * de * tk * bf16b        # streamed X2e K-tile (double-buffered)
            + 2 * 8 * tk * f32b        # Y K-tile (sublane-padded)
            + 2 * 2 * de * tb * bf16b  # resident X1 hi + lo (double-buffered)
            + 2 * 8 * tb * f32b        # output block
            + 8 * tb * f32b            # accumulator scratch
            + 4 * tk * tb * f32b)      # (tk, tb) matmul result + F-chain temps


def _choose_tiles(de, B, K, budget, tb, tk):
    tb_cands = [c for c in (512, 256, 128) if c <= B and B % c == 0] or [B]
    # v7x megacore: prefer >= 2 B tiles so the "parallel" axis shards across
    # both TensorCores (no effect on single-TC v5e/v6e).
    multi = [c for c in tb_cands if B // c >= 2]
    tb_order = multi if multi else tb_cands
    # Prefer tk in 256-512: larger tk only saves ~0.35us/step of grid overhead
    # but inflates the unbudgeted (tk, tb) temporaries.
    tk_order = [c for c in (512, 256, 128) if c <= K and K % c == 0] or [K]
    for cand_tk in tk_order:
        for cand_tb in tb_order:
            if _vmem_bytes(de, tb or cand_tb, tk or cand_tk) <= budget:
                return tb or cand_tb, tk or cand_tk
    return tb or tb_order[-1], tk or tk_order[-1]


def knn_fit_forward(x1_bits, x2_bits, y_knn, t_w, alpha, beta, kparam, jparam,
                    eps=1e-6, tb=None, tk=None, refine_recip=True):
    x1_bits = x1_bits.astype(jnp.float32)
    x2_bits = x2_bits.astype(jnp.float32)
    D, B = x1_bits.shape
    D2, K = x2_bits.shape
    assert D == D2
    assert B % 128 == 0 and K % 128 == 0

    # One extra row carries the per-query affine correction; pad the contraction
    # depth to a multiple of 16 (bf16 sublane packing).
    de = ((D + 1 + 15) // 16) * 16
    pad = de - (D + 1)

    # ---- VMEM budget derived from the device (v7x: 64 MiB vs 128 MiB) ----
    try:
        vmem_cap = int(pltpu.get_tpu_info().vmem_capacity_bytes)
    except Exception:
        vmem_cap = 64 * 2 ** 20          # conservative fallback (v7x per-core)
    budget = max(24 * 2 ** 20, min(3 * vmem_cap // 4, 100 * 2 ** 20))
    tb, tk = _choose_tiles(de, B, K, budget, tb, tk)
    assert B % tb == 0 and K % tk == 0
    assert tb % 128 == 0 and tk % 128 == 0

    # ---- grid-invariant work hoisted out of the kernel (cheap XLA ops) ----
    w = t_w.astype(jnp.float32)
    norm_w = jnp.sum(jnp.abs(w)) + jnp.float32(eps)
    inv2 = 2.0 / norm_w
    # 2*(1 - WHDx/norm) = sum_d X2[d,k]*(2w[d]/norm)*(2*X1[d,b]-1) + 2*c1[b]
    # with c1[b] = 1 - (w @ X1)[b]/norm; c1 is folded in as one extra row
    # paired with a row of ones in X2e, and the per-neighbor s2 term vanishes.
    x1_main = inv2 * w[:, None] * (2.0 * x1_bits - 1.0)               # (D, B)
    c1_row = (2.0 - inv2 * (w @ x1_bits))[None, :]                    # (1, B)
    x1e = jnp.concatenate(
        [x1_main, c1_row, jnp.zeros((pad, B), jnp.float32)], axis=0)  # (de, B)
    # Exact-to-~f32 bf16 hi/lo split of the only non-exact MXU operand.
    x1h = x1e.astype(jnp.bfloat16)
    x1l = (x1e - x1h.astype(jnp.float32)).astype(jnp.bfloat16)
    # X2e holds only {0,1} values -> exact in bf16 (halves streamed HBM bytes).
    x2e = jnp.concatenate(
        [x2_bits, jnp.ones((1, K), jnp.float32),
         jnp.zeros((pad, K), jnp.float32)], axis=0).astype(jnp.bfloat16)
    y_row = y_knn.astype(jnp.float32).reshape(1, K)

    kc = jnp.clip(jnp.float32(kparam), -1.0, 1.0)
    jc = jnp.clip(jnp.float32(jparam), -1.0, 1.0)
    betaf = jnp.float32(beta)
    params = jnp.stack([
        1.0 + kc,                                              # ck
        (1.0 - jc) * (1.0 + kc),                               # pp
        kc * (1.0 - jc),                                       # qq
        2.0 * jc,                                              # b2
        betaf * (1.0 + jc) * 0.5 / jnp.float32(K),             # scale
        betaf * (jnp.float32(alpha) + 0.5 * jnp.mean(y_row)),  # bias
    ]).astype(jnp.float32)

    grid_spec = pltpu.PrefetchScalarGridSpec(
        num_scalar_prefetch=0,
        grid=(B // tb, K // tk),
        in_specs=[
            pl.BlockSpec(memory_space=pltpu.MemorySpace.SMEM),   # 6 scalars
            pl.BlockSpec((de, tb), lambda bi, kt: (0, bi)),      # X1e hi (resident over K)
            pl.BlockSpec((de, tb), lambda bi, kt: (0, bi)),      # X1e lo (resident over K)
            pl.BlockSpec((de, tk), lambda bi, kt: (0, kt)),      # X2e K-tile (streamed)
            pl.BlockSpec((1, tk), lambda bi, kt: (0, kt)),       # Y K-tile
        ],
        out_specs=pl.BlockSpec((1, tb), lambda bi, kt: (0, bi)),
        scratch_shapes=[pltpu.VMEM((1, tb), jnp.float32)],
    )

    out = pl.pallas_call(
        functools.partial(_knn_fit_kernel, refine_recip=refine_recip),
        out_shape=jax.ShapeDtypeStruct((1, B), jnp.float32),
        grid_spec=grid_spec,
        compiler_params=pltpu.CompilerParams(
            dimension_semantics=("parallel", "arbitrary"),
            vmem_limit_bytes=int(budget)),
    )(params, x1h, x1l, x2e, y_row)
    return out.reshape(B)


# ---------------- pure-JAX reference (faithful PyTorch translation) ----------
def _F_ref(x, jparam, kparam):
    x = jnp.clip(x, 0.0, 1.0)
    j = jnp.clip(jparam, -1.0, 1.0)
    k = jnp.clip(kparam, -1.0, 1.0)
    inner = x * (1.0 - k) / (k * (1.0 - 2.0 * jnp.abs(x)) + 1.0)
    t = inner * 2.0 - 1.0
    return (1.0 + t * (1.0 + j) / (-j * (1.0 - 2.0 * jnp.abs(t)) + 1.0)) / 2.0


def ref_forward(x1_bits, x2_bits, y_knn, t_w, alpha, beta, kparam, jparam, eps):
    diff = jnp.abs(x2_bits[:, :, None] - x1_bits[:, None, :])   # (D, K, B)
    whdx = jnp.tensordot(t_w, diff, axes=([0], [0]))            # (K, B)
    norm_w = jnp.sum(jnp.abs(t_w)) + eps
    fqx = _F_ref(1.0 - whdx / norm_w, jparam, kparam)
    score = jnp.mean(fqx * y_knn[:, None], axis=0)
    return beta * (score + alpha)


if __name__ == "__main__":
    # D = feature bits, B = query batch, K = reference (neighbor) set size
    D, B, K = 256, 128, 256
    eps = 1e-6

    key = jax.random.PRNGKey(0)
    k1, k2, k3, k4 = jax.random.split(key, 4)
    x1_bits = jax.random.bernoulli(k1, 0.5, (D, B)).astype(jnp.float32)
    x2_bits = jax.random.bernoulli(k2, 0.5, (D, K)).astype(jnp.float32)
    y_knn = jax.random.bernoulli(k3, 0.5, (K,)).astype(jnp.float32) * 2.0 - 1.0

    # TODO(synk): WHDxFunction's custom backward (which consumes
    # t_X2_byDimBlock_T_bits) is not part of the forward pass and is omitted.

    # 1) module defaults (kNNFit.__init__ with init_W=None, alpha=0, beta=1)
    t_w = jnp.full((D,), math.sqrt(1.0 / D), dtype=jnp.float32)
    out = jax.block_until_ready(
        knn_fit_forward(x1_bits, x2_bits, y_knn, t_w, 0.0, 1.0, 0.0, 0.0, eps))
    ref = ref_forward(x1_bits, x2_bits, y_knn, t_w, 0.0, 1.0, 0.0, 0.0, eps)
    assert out.shape == (B,)
    assert jnp.allclose(out, ref, atol=1e-4, rtol=1e-4), "mismatch (defaults)"

    # 2) non-trivial learned parameters (full F() nonlinearity, non-uniform W)
    t_w2 = jax.random.uniform(k4, (D,), jnp.float32, 0.01, 0.2)
    out2 = jax.block_until_ready(
        knn_fit_forward(x1_bits, x2_bits, y_knn, t_w2, 0.1, 1.5, 0.3, -0.25, eps))
    ref2 = ref_forward(x1_bits, x2_bits, y_knn, t_w2, 0.1, 1.5, 0.3, -0.25, eps)
    assert jnp.allclose(out2, ref2, atol=1e-4, rtol=1e-4), "mismatch (params)"

    # 3) near-boundary k / j (review concern: small F() denominators)
    out3 = jax.block_until_ready(
        knn_fit_forward(x1_bits, x2_bits, y_knn, t_w2, -0.05, 2.0, 0.9, -0.8, eps))
    ref3 = ref_forward(x1_bits, x2_bits, y_knn, t_w2, -0.05, 2.0, 0.9, -0.8, eps)
    assert jnp.allclose(out3, ref3, atol=1e-4, rtol=1e-4), "mismatch (boundary)"

    print("KERNEL_OK")
</pallas_src>

<mosaic_0001>
module attributes {stable_mosaic.version = 11 : i64} {
  func.func @_knn_fit_kernel(%arg0: i32, %arg1: i32, %arg2: memref<6xf32, #tpu.memory_space<smem>>, %arg3: memref<272x128xbf16, #tpu.memory_space<vmem>>, %arg4: memref<272x128xbf16, #tpu.memory_space<vmem>>, %arg5: memref<272x256xbf16, #tpu.memory_space<vmem>>, %arg6: memref<1x256xf32, #tpu.memory_space<vmem>>, %arg7: memref<1x128xf32, #tpu.memory_space<vmem>>, %arg8: memref<1x128xf32, #tpu.memory_space<vmem>>) attributes {dimension_semantics = [#tpu.dimension_semantics<parallel>, #tpu.dimension_semantics<arbitrary>], iteration_bounds = array<i64: 1, 1>, scalar_prefetch = 0 : i64, scratch_operands = 1 : i64, tpu.core_type = #tpu.core_type<tc>, window_params = [{transform_indices = @transform_0, window_bounds = array<i64: 6>}, {transform_indices = @transform_1, window_bounds = array<i64: 272, 128>}, {transform_indices = @transform_2, window_bounds = array<i64: 272, 128>}, {transform_indices = @transform_3, window_bounds = array<i64: 272, 256>}, {transform_indices = @transform_4, window_bounds = array<i64: 1, 256>}, {transform_indices = @transform_5, window_bounds = array<i64: 1, 128>}]} {
    %c0_i32 = arith.constant 0 : i32
    %0 = arith.cmpi eq, %arg1, %c0_i32 : i32
    %1 = arith.extui %0 : i1 to i32
    %c0_i32_0 = arith.constant 0 : i32
    %2 = arith.cmpi ne, %1, %c0_i32_0 : i32
    scf.if %2 {
      %cst_22 = arith.constant 0.000000e+00 : f32
      %44 = vector.broadcast %cst_22 : f32 to vector<1x128xf32>
      %c0_23 = arith.constant 0 : index
      %c0_24 = arith.constant 0 : index
      %45 = vector.load %arg8[%c0_23, %c0_24] : memref<1x128xf32, #tpu.memory_space<vmem>>, vector<1x128xf32>
      tpu.vector_store %arg8[%c0_23, %c0_24], %44 {strides = array<i32>} : memref<1x128xf32, #tpu.memory_space<vmem>>, vector<1x128xf32>,
    } else {
    }
    %c0 = arith.constant 0 : index
    %3 = memref.load %arg2[%c0] : memref<6xf32, #tpu.memory_space<smem>>
    %c1 = arith.constant 1 : index
    %4 = memref.load %arg2[%c1] : memref<6xf32, #tpu.memory_space<smem>>
    %c2 = arith.constant 2 : index
    %5 = memref.load %arg2[%c2] : memref<6xf32, #tpu.memory_space<smem>>
    %c3 = arith.constant 3 : index
    %6 = memref.load %arg2[%c3] : memref<6xf32, #tpu.memory_space<smem>>
    %c4 = arith.constant 4 : index
    %7 = memref.load %arg2[%c4] : memref<6xf32, #tpu.memory_space<smem>>
    %c5 = arith.constant 5 : index
    %8 = memref.load %arg2[%c5] : memref<6xf32, #tpu.memory_space<smem>>
    %c0_1 = arith.constant 0 : index
    %c0_2 = arith.constant 0 : index
    %9 = vector.load %arg5[%c0_1, %c0_2] : memref<272x256xbf16, #tpu.memory_space<vmem>>, vector<272x256xbf16>
    %c0_3 = arith.constant 0 : index
    %c0_4 = arith.constant 0 : index
    %10 = vector.load %arg3[%c0_3, %c0_4] : memref<272x128xbf16, #tpu.memory_space<vmem>>, vector<272x128xbf16>
    %cst = arith.constant dense<0.000000e+00> : vector<256x128xf32>
    %11 = tpu.matmul %9, %10, %cst {dimension_numbers = #tpu.dot_dimension_numbers<[0], [0], [1], [1], [0, 1, 1, 1], [], []>} : vector<272x256xbf16>, vector<272x128xbf16>, vector<256x128xf32> -> vector<256x128xf32>
    %c0_5 = arith.constant 0 : index
    %c0_6 = arith.constant 0 : index
    %12 = vector.load %arg5[%c0_5, %c0_6] : memref<272x256xbf16, #tpu.memory_space<vmem>>, vector<272x256xbf16>
    %c0_7 = arith.constant 0 : index
    %c0_8 = arith.constant 0 : index
    %13 = vector.load %arg4[%c0_7, %c0_8] : memref<272x128xbf16, #tpu.memory_space<vmem>>, vector<272x128xbf16>
    %cst_9 = arith.constant dense<0.000000e+00> : vector<256x128xf32>
    %14 = tpu.matmul %12, %13, %cst_9 {dimension_numbers = #tpu.dot_dimension_numbers<[0], [0], [1], [1], [0, 1, 1, 1], [], []>} : vector<272x256xbf16>, vector<272x128xbf16>, vector<256x128xf32> -> vector<256x128xf32>
    %15 = arith.addf %11, %14 : vector<256x128xf32>
    %cst_10 = arith.constant 0.000000e+00 : f32
    %cst_11 = arith.constant 2.000000e+00 : f32
    %16 = vector.broadcast %cst_10 : f32 to vector<256x128xf32>
    %17 = arith.maximumf %16, %15 : vector<256x128xf32>
    %18 = vector.broadcast %cst_11 : f32 to vector<256x128xf32>
    %19 = arith.minimumf %18, %17 : vector<256x128xf32>
    %20 = vector.broadcast %3 : f32 to vector<256x128xf32>
    %21 = arith.subf %19, %20 : vector<256x128xf32>
    %22 = vector.broadcast %5 : f32 to vector<256x128xf32>
    %23 = arith.mulf %22, %19 : vector<256x128xf32>
    %24 = vector.broadcast %4 : f32 to vector<256x128xf32>
    %25 = arith.subf %24, %23 : vector<256x128xf32>
    %26 = math.absf %21 : vector<256x128xf32>
    %27 = vector.broadcast %6 : f32 to vector<256x128xf32>
    %28 = arith.mulf %27, %26 : vector<256x128xf32>
    %29 = arith.addf %25, %28 : vector<256x128xf32>
    %30 = tpu.reciprocal %29 {approx = true} : vector<256x128xf32> -> vector<256x128xf32>
    %31 = arith.mulf %29, %30 : vector<256x128xf32>
    %cst_12 = arith.constant 2.000000e+00 : f32
    %32 = vector.broadcast %cst_12 : f32 to vector<256x128xf32>
    %33 = arith.subf %32, %31 : vector<256x128xf32>
    %34 = arith.mulf %30, %33 : vector<256x128xf32>
    %35 = arith.mulf %21, %34 : vector<256x128xf32>
    %c0_13 = arith.constant 0 : index
    %c0_14 = arith.constant 0 : index
    %36 = vector.load %arg8[%c0_13, %c0_14] : memref<1x128xf32, #tpu.memory_space<vmem>>, vector<1x128xf32>
    %c0_15 = arith.constant 0 : index
    %c0_16 = arith.constant 0 : index
    %37 = vector.load %arg6[%c0_15, %c0_16] : memref<1x256xf32, #tpu.memory_space<vmem>>, vector<1x256xf32>
    %cst_17 = arith.constant dense<0.000000e+00> : vector<1x128xf32>
    %38 = tpu.matmul %37, %35, %cst_17 {dimension_numbers = #tpu.dot_dimension_numbers<[1], [0], [0], [1], [0, 0, 1, 1], [], []>} : vector<1x256xf32>, vector<256x128xf32>, vector<1x128xf32> -> vector<1x128xf32>
    %39 = arith.addf %36, %38 : vector<1x128xf32>
    %c0_18 = arith.constant 0 : index
    %c0_19 = arith.constant 0 : index
    %40 = vector.load %arg8[%c0_18, %c0_19] : memref<1x128xf32, #tpu.memory_space<vmem>>, vector<1x128xf32>
    tpu.vector_store %arg8[%c0_18, %c0_19], %39 {strides = array<i32>} : memref<1x128xf32, #tpu.memory_space<vmem>>, vector<1x128xf32>,
    %c0_i32_20 = arith.constant 0 : i32
    %41 = arith.cmpi eq, %arg1, %c0_i32_20 : i32
    %42 = arith.extui %41 : i1 to i32
    %c0_i32_21 = arith.constant 0 : i32
    %43 = arith.cmpi ne, %42, %c0_i32_21 : i32
    scf.if %43 {
      %c0_22 = arith.constant 0 : index
      %c0_23 = arith.constant 0 : index
      %44 = vector.load %arg8[%c0_22, %c0_23] : memref<1x128xf32, #tpu.memory_space<vmem>>, vector<1x128xf32>
      %45 = vector.broadcast %7 : f32 to vector<1x128xf32>
      %46 = arith.mulf %45, %44 : vector<1x128xf32>
      %47 = vector.broadcast %8 : f32 to vector<1x128xf32>
      %48 = arith.addf %46, %47 : vector<1x128xf32>
      %c0_24 = arith.constant 0 : index
      %c0_25 = arith.constant 0 : index
      %49 = vector.load %arg7[%c0_24, %c0_25] : memref<1x128xf32, #tpu.memory_space<vmem>>, vector<1x128xf32>
      tpu.vector_store %arg7[%c0_24, %c0_25], %48 {strides = array<i32>} : memref<1x128xf32, #tpu.memory_space<vmem>>, vector<1x128xf32>,
    } else {
    }
    return
  }
  func.func @transform_0(%arg0: i32, %arg1: i32) -> i32 {
    %c0_i32 = arith.constant 0 : i32
    %c0_i32_0 = arith.constant 0 : i32
    return %c0_i32 : i32
  }
  func.func @transform_1(%arg0: i32, %arg1: i32) -> (i32, i32) {
    %c0_i32 = arith.constant 0 : i32
    %c0_i32_0 = arith.constant 0 : i32
    return %c0_i32, %arg0 : i32, i32
  }
  func.func @transform_2(%arg0: i32, %arg1: i32) -> (i32, i32) {
    %c0_i32 = arith.constant 0 : i32
    %c0_i32_0 = arith.constant 0 : i32
    return %c0_i32, %arg0 : i32, i32
  }
  func.func @transform_3(%arg0: i32, %arg1: i32) -> (i32, i32) {
    %c0_i32 = arith.constant 0 : i32
    %c0_i32_0 = arith.constant 0 : i32
    return %c0_i32, %arg1 : i32, i32
  }
  func.func @transform_4(%arg0: i32, %arg1: i32) -> (i32, i32) {
    %c0_i32 = arith.constant 0 : i32
    %c0_i32_0 = arith.constant 0 : i32
    return %c0_i32, %arg1 : i32, i32
  }
  func.func @transform_5(%arg0: i32, %arg1: i32) -> (i32, i32) {
    %c0_i32 = arith.constant 0 : i32
    %c0_i32_0 = arith.constant 0 : i32
    return %c0_i32, %arg0 : i32, i32
  }
}

</mosaic_0001>

<llo_original>
// kernel: tpu_custom_call.1
$region0: #{tpu_custom_call.1}
  #allocation0 [shape = 'u32[]', space=smem, size = 0x4, offset = 0x4, fixed_abs, tag = 'smem constant byte address 0x4 - core index']
  #allocation1 [shape = 'u32[144,128]{1,0:T(1,128)}', space=vmem, size = 0x12000, scoped, tag = 'internal scratch']
  #allocation2 [shape = 'f32[1,128]{1,0:T(1,128)}', space=vmem, size = 0x200, scoped, tag = 'scratch operand']
  %s0 = inlined_call_operand.hbm [shape: f32[6], index: 0, kind: input, shape index: {}]
  %s1 = inlined_call_operand.hbm [shape: bf16[272,128], index: 1, kind: input, shape index: {}]
  %s2 = inlined_call_operand.hbm [shape: bf16[272,128], index: 2, kind: input, shape index: {}]
  %s3 = inlined_call_operand.hbm [shape: bf16[272,256], index: 3, kind: input, shape index: {}]
  %s4 = inlined_call_operand.vmem [shape: f32[1,256], index: 4, kind: input, shape index: {}]
  %s5 = inlined_call_operand.hbm [shape: f32[1,128], index: 5, kind: output, shape index: {}]
  %s6 = sld [smem:[#allocation0]]
  $region54: #{tpu_custom_call.1} parent=0
    _
  %s8 = ssub.s32 1, %s6
  %s9 = scalar_select 0, %s8, %s6
  $region1: #{tpu_custom_call.1} parent=0
    #allocation3 [shape = 'u8[512]{0}', space=smem, size = 0x200, scoped, tag = 'input window, operand 0, single buffered']
    #allocation4 [shape = 's32[1]{0}', space=sflag, size = 0x4, scoped, tag = 'scoped memory for tpu_custom_call.1']
    #allocation5 [shape = 's32[1]{0}', space=sflag, size = 0x4, scoped, tag = 'scoped memory for tpu_custom_call.1']
    #allocation6 [shape = 's32[1]{0}', space=sflag, size = 0x4, scoped, tag = 'scoped memory for tpu_custom_call.1']
    #allocation7 [shape = 'u8[69632]{0}', space=vmem, size = 0x11000, scoped, tag = 'input window, operand 1, single buffered']
    #allocation8 [shape = 'u8[69632]{0}', space=vmem, size = 0x11000, scoped, tag = 'input window, operand 2, single buffered']
    #allocation9 [shape = 's32[1]{0}', space=sflag, size = 0x4, scoped, tag = 'scoped memory for tpu_custom_call.1']
    #allocation10 [shape = 'u8[139264]{0}', space=vmem, size = 0x22000, scoped, tag = 'input window, operand 3, single buffered']
    #allocation11 [shape = 'u8[512]{0}', space=vmem, size = 0x400, scoped, tag = 'output window, operand 0, single buffered']
    %10 = vsyncpa [#allocation6], 0
    %11 = vsyncpa [#allocation4], 0
    %12 = vsyncpa [#allocation9], 0
    %13 = vsyncpa [#allocation5], 0
    // Predicated region
    $region2: #{tpu_custom_call.1} parent=1 // pred_check
      _
    $region3: #{tpu_custom_call.1} parent=1 // pred_check_branch
      %15 = sbr.rel (0) target = $region5
    $region4: #{tpu_custom_call.1} parent=1 // pred_region
      %s17 = ssub.s32 16, 16
      %18 = vsyncadd [#allocation6], %s17
      %21 = dma.hbm_to_smem %s0, 16, [#allocation3], [#allocation6]
    $region5: #{tpu_custom_call.1} parent=1 // pred_fallthru
      _
    // Predicated region
    $region6: #{tpu_custom_call.1} parent=1 // pred_check
      _
    $region7: #{tpu_custom_call.1} parent=1 // pred_check_branch
      %23 = sbr.rel (0) target = $region9
    $region8: #{tpu_custom_call.1} parent=1 // pred_region
      %s25 = ssub.s32 2176, 2176
      %26 = vsyncadd [#allocation4], %s25
      %s27 = sshll.u32 [#allocation7], 4
      %s28 = int_to_ptr.vmem [resolvable:$true] %s27
      %33 = dma.hbm_to_vmem [thread:$0]  %s1, 2176, %s28, [#allocation4], 64, 64, 4
    $region9: #{tpu_custom_call.1} parent=1 // pred_fallthru
      _
    // Predicated region
    $region10: #{tpu_custom_call.1} parent=1 // pred_check
      _
    $region11: #{tpu_custom_call.1} parent=1 // pred_check_branch
      %35 = sbr.rel (0) target = $region13
    $region12: #{tpu_custom_call.1} parent=1 // pred_region
      %s37 = ssub.s32 2176, 2176
      %38 = vsyncadd [#allocation9], %s37
      %s39 = sshll.u32 [#allocation8], 4
      %s40 = int_to_ptr.vmem [resolvable:$true] %s39
      %45 = dma.hbm_to_vmem [thread:$0]  %s2, 2176, %s40, [#allocation9], 64, 64, 4
    $region13: #{tpu_custom_call.1} parent=1 // pred_fallthru
      _
    // Predicated region
    $region14: #{tpu_custom_call.1} parent=1 // pred_check
      _
    $region15: #{tpu_custom_call.1} parent=1 // pred_check_branch
      %47 = sbr.rel (0) target = $region17
    $region16: #{tpu_custom_call.1} parent=1 // pred_region
      %s49 = ssub.s32 4352, 4352
      %50 = vsyncadd [#allocation9], %s49
      %s51 = sshll.u32 [#allocation10], 4
      %s52 = int_to_ptr.vmem [resolvable:$true] %s51
      %57 = dma.hbm_to_vmem [thread:$0]  %s3, 4352, %s52, [#allocation9], 128, 128, 8
    $region17: #{tpu_custom_call.1} parent=1 // pred_fallthru
      _
    // Predicated region
    $region18: #{tpu_custom_call.1} parent=1 // pred_check
      _
    $region19: #{tpu_custom_call.1} parent=1 // pred_check_branch
      %59 = sbr.rel (0) target = $region21
    $region20: #{tpu_custom_call.1} parent=1 // pred_region
      _
    $region21: #{tpu_custom_call.1} parent=1 // pred_fallthru
      _
    // Predicated region
    $region22: #{tpu_custom_call.1} parent=1 // pred_check
      _
    $region23: #{tpu_custom_call.1} parent=1 // pred_check_branch
      %61 = sbr.rel (0) target = $region25
    $region24: #{tpu_custom_call.1} parent=1 // pred_region
      %62 = dma.done [#allocation6], 16
    $region25: #{tpu_custom_call.1} parent=1 // pred_fallthru
      _
    // Predicated region
    $region26: #{tpu_custom_call.1} parent=1 // pred_check
      _
    $region27: #{tpu_custom_call.1} parent=1 // pred_check_branch
      %64 = sbr.rel (0) target = $region29
    $region28: #{tpu_custom_call.1} parent=1 // pred_region
      %65 = dma.done [#allocation4], 2176
    $region29: #{tpu_custom_call.1} parent=1 // pred_fallthru
      _
    // Predicated region
    $region30: #{tpu_custom_call.1} parent=1 // pred_check
      _
    $region31: #{tpu_custom_call.1} parent=1 // pred_check_branch
      %67 = sbr.rel (0) target = $region33
    $region32: #{tpu_custom_call.1} parent=1 // pred_region
      %68 = dma.done [#allocation9], 2176
    $region33: #{tpu_custom_call.1} parent=1 // pred_fallthru
      _
    // Predicated region
    $region34: #{tpu_custom_call.1} parent=1 // pred_check
      _
    $region35: #{tpu_custom_call.1} parent=1 // pred_check_branch
      %70 = sbr.rel (0) target = $region37
    $region36: #{tpu_custom_call.1} parent=1 // pred_region
      %71 = dma.done [#allocation9], 4352
    $region37: #{tpu_custom_call.1} parent=1 // pred_fallthru
      _
    %72 = sfence
    %p74 = scmp.eq.s32.totalorder 0, 0
    // Predicated region
    $region38: #{tpu_custom_call.1} parent=1 // pred_check
      %p75 = pneg %p74
    $region39: #{tpu_custom_call.1} parent=1 // pred_check_branch
      %77 = sbr.rel (%p75) target = $region41
    $region40: #{tpu_custom_call.1} parent=1 // pred_region
      %78 = vst [vmem:[#allocation2] sm:$0x1] 0.0
    $region41: #{tpu_custom_call.1} parent=1 // pred_fallthru
      _
    %s79 = sld [smem:[#allocation3]]
    %s80 = sld [smem:[#allocation3 + $0x1]]
    %s81 = sld [smem:[#allocation3 + $0x2]]
    %s82 = sld [smem:[#allocation3 + $0x3]]
    %s83 = sld [smem:[#allocation3 + $0x4]]
    %s84 = sld [smem:[#allocation3 + $0x5]]
    %v85 = vld [vmem:[#allocation10] sm:$0xff]
    %v86 = vld [vmem:[#allocation10 + $0x8] sm:$0xff]
    %v87 = vld [vmem:[#allocation10 + $0x10] sm:$0xff]
    %v88 = vld [vmem:[#allocation10 + $0x18] sm:$0xff]
    %v89 = vld [vmem:[#allocation10 + $0x20] sm:$0xff]
    %v90 = vld [vmem:[#allocation10 + $0x28] sm:$0xff]
    %v91 = vld [vmem:[#allocation10 + $0x30] sm:$0xff]
    %v92 = vld [vmem:[#allocation10 + $0x38] sm:$0xff]
    %v93 = vld [vmem:[#allocation10 + $0x40] sm:$0xff]
    %v94 = vld [vmem:[#allocation10 + $0x48] sm:$0xff]
    %v95 = vld [vmem:[#allocation10 + $0x50] sm:$0xff]
    %v96 = vld [vmem:[#allocation10 + $0x58] sm:$0xff]
    %v97 = vld [vmem:[#allocation10 + $0x60] sm:$0xff]
    %v98 = vld [vmem:[#allocation10 + $0x68] sm:$0xff]
    %v99 = vld [vmem:[#allocation10 + $0x70] sm:$0xff]
    %v100 = vld [vmem:[#allocation10 + $0x78] sm:$0xff]
    %v101 = vld [vmem:[#allocation10 + $0x80] sm:$0xff]
    %v102 = vld [vmem:[#allocation10 + $0x88] sm:$0xff]
    %v103 = vld [vmem:[#allocation10 + $0x90] sm:$0xff]
    %v104 = vld [vmem:[#allocation10 + $0x98] sm:$0xff]
    %v105 = vld [vmem:[#allocation10 + $0xa0] sm:$0xff]
    %v106 = vld [vmem:[#allocation10 + $0xa8] sm:$0xff]
    %v107 = vld [vmem:[#allocation10 + $0xb0] sm:$0xff]
    %v108 = vld [vmem:[#allocation10 + $0xb8] sm:$0xff]
    %v109 = vld [vmem:[#allocation10 + $0xc0] sm:$0xff]
    %v110 = vld [vmem:[#allocation10 + $0xc8] sm:$0xff]
    %v111 = vld [vmem:[#allocation10 + $0xd0] sm:$0xff]
    %v112 = vld [vmem:[#allocation10 + $0xd8] sm:$0xff]
    %v113 = vld [vmem:[#allocation10 + $0xe0] sm:$0xff]
    %v114 = vld [vmem:[#allocation10 + $0xe8] sm:$0xff]
    %v115 = vld [vmem:[#allocation10 + $0xf0] sm:$0xff]
    %v116 = vld [vmem:[#allocation10 + $0xf8] sm:$0xff]
    %v117 = vld [vmem:[#allocation10 + $0x100] sm:$0xff]
    %v118 = vld [vmem:[#allocation10 + $0x108] sm:$0xff]
    %v119 = vld [vmem:[#allocation7] sm:$0xf]
    %v120 = vld [vmem:[#allocation7 + $0x4] sm:$0xf]
    %v121 = vld [vmem:[#allocation7 + $0x8] sm:$0xf]
    %v122 = vld [vmem:[#allocation7 + $0xc] sm:$0xf]
    %v123 = vld [vmem:[#allocation7 + $0x10] sm:$0xf]
    %v124 = vld [vmem:[#allocation7 + $0x14] sm:$0xf]
    %v125 = vld [vmem:[#allocation7 + $0x18] sm:$0xf]
    %v126 = vld [vmem:[#allocation7 + $0x1c] sm:$0xf]
    %v127 = vld [vmem:[#allocation7 + $0x20] sm:$0xf]
    %v128 = vld [vmem:[#allocation7 + $0x24] sm:$0xf]
    %v129 = vld [vmem:[#allocation7 + $0x28] sm:$0xf]
    %v130 = vld [vmem:[#allocation7 + $0x2c] sm:$0xf]
    %v131 = vld [vmem:[#allocation7 + $0x30] sm:$0xf]
    %v132 = vld [vmem:[#allocation7 + $0x34] sm:$0xf]
    %v133 = vld [vmem:[#allocation7 + $0x38] sm:$0xf]
    %v134 = vld [vmem:[#allocation7 + $0x3c] sm:$0xf]
    %v135 = vld [vmem:[#allocation7 + $0x40] sm:$0xf]
    %v136 = vld [vmem:[#allocation7 + $0x44] sm:$0xf]
    %v137 = vld [vmem:[#allocation7 + $0x48] sm:$0xf]
    %v138 = vld [vmem:[#allocation7 + $0x4c] sm:$0xf]
    %v139 = vld [vmem:[#allocation7 + $0x50] sm:$0xf]
    %v140 = vld [vmem:[#allocation7 + $0x54] sm:$0xf]
    %v141 = vld [vmem:[#allocation7 + $0x58] sm:$0xf]
    %v142 = vld [vmem:[#allocation7 + $0x5c] sm:$0xf]
    %v143 = vld [vmem:[#allocation7 + $0x60] sm:$0xf]
    %v144 = vld [vmem:[#allocation7 + $0x64] sm:$0xf]
    %v145 = vld [vmem:[#allocation7 + $0x68] sm:$0xf]
    %v146 = vld [vmem:[#allocation7 + $0x6c] sm:$0xf]
    %v147 = vld [vmem:[#allocation7 + $0x70] sm:$0xf]
    %v148 = vld [vmem:[#allocation7 + $0x74] sm:$0xf]
    %v149 = vld [vmem:[#allocation7 + $0x78] sm:$0xf]
    %v150 = vld [vmem:[#allocation7 + $0x7c] sm:$0xf]
    %v151 = vld [vmem:[#allocation7 + $0x80] sm:$0xf]
    %v152 = vld [vmem:[#allocation7 + $0x84] sm:$0xf]
    %v153 = vld [vmem:[#allocation8] sm:$0xf]
    %v154 = vld [vmem:[#allocation8 + $0x4] sm:$0xf]
    %v155 = vld [vmem:[#allocation8 + $0x8] sm:$0xf]
    %v156 = vld [vmem:[#allocation8 + $0xc] sm:$0xf]
    %v157 = vld [vmem:[#allocation8 + $0x10] sm:$0xf]
    %v158 = vld [vmem:[#allocation8 + $0x14] sm:$0xf]
    %v159 = vld [vmem:[#allocation8 + $0x18] sm:$0xf]
    %v160 = vld [vmem:[#allocation8 + $0x1c] sm:$0xf]
    %v161 = vld [vmem:[#allocation8 + $0x20] sm:$0xf]
    %v162 = vld [vmem:[#allocation8 + $0x24] sm:$0xf]
    %v163 = vld [vmem:[#allocation8 + $0x28] sm:$0xf]
    %v164 = vld [vmem:[#allocation8 + $0x2c] sm:$0xf]
    %v165 = vld [vmem:[#allocation8 + $0x30] sm:$0xf]
    %v166 = vld [vmem:[#allocation8 + $0x34] sm:$0xf]
    %v167 = vld [vmem:[#allocation8 + $0x38] sm:$0xf]
    %v168 = vld [vmem:[#allocation8 + $0x3c] sm:$0xf]
    %v169 = vld [vmem:[#allocation8 + $0x40] sm:$0xf]
    %v170 = vld [vmem:[#allocation8 + $0x44] sm:$0xf]
    %v171 = vld [vmem:[#allocation8 + $0x48] sm:$0xf]
    %v172 = vld [vmem:[#allocation8 + $0x4c] sm:$0xf]
    %v173 = vld [vmem:[#allocation8 + $0x50] sm:$0xf]
    %v174 = vld [vmem:[#allocation8 + $0x54] sm:$0xf]
    %v175 = vld [vmem:[#allocation8 + $0x58] sm:$0xf]
    %v176 = vld [vmem:[#allocation8 + $0x5c] sm:$0xf]
    %v177 = vld [vmem:[#allocation8 + $0x60] sm:$0xf]
    %v178 = vld [vmem:[#allocation8 + $0x64] sm:$0xf]
    %v179 = vld [vmem:[#allocation8 + $0x68] sm:$0xf]
    %v180 = vld [vmem:[#allocation8 + $0x6c] sm:$0xf]
    %v181 = vld [vmem:[#allocation8 + $0x70] sm:$0xf]
    %v182 = vld [vmem:[#allocation8 + $0x74] sm:$0xf]
    %v183 = vld [vmem:[#allocation8 + $0x78] sm:$0xf]
    %v184 = vld [vmem:[#allocation8 + $0x7c] sm:$0xf]
    %v185 = vld [vmem:[#allocation8 + $0x80] sm:$0xf]
    %v186 = vld [vmem:[#allocation8 + $0x84] sm:$0xf]
    %v221 = vunpack.c.l.b16 %v85
    %v222 = vunpack.c.h.b16 %v85
    %v223 = vunpack.c.l.b16 %v86
    %v224 = vunpack.c.h.b16 %v86
    %v225 = vunpack.c.l.b16 %v87
    %v226 = vunpack.c.h.b16 %v87
    %v227 = vunpack.c.l.b16 %v88
    %v228 = vunpack.c.h.b16 %v88
    %v229 = vunpack.c.l.b16 %v89
    %v230 = vunpack.c.h.b16 %v89
    %v231 = vunpack.c.l.b16 %v90
    %v232 = vunpack.c.h.b16 %v90
    %v233 = vunpack.c.l.b16 %v91
    %v234 = vunpack.c.h.b16 %v91
    %v235 = vunpack.c.l.b16 %v92
    %v236 = vunpack.c.h.b16 %v92
    %v237 = vunpack.c.l.b16 %v93
    %v238 = vunpack.c.h.b16 %v93
    %v239 = vunpack.c.l.b16 %v94
    %v240 = vunpack.c.h.b16 %v94
    %v241 = vunpack.c.l.b16 %v95
    %v242 = vunpack.c.h.b16 %v95
    %v243 = vunpack.c.l.b16 %v96
    %v244 = vunpack.c.h.b16 %v96
    %v245 = vunpack.c.l.b16 %v97
    %v246 = vunpack.c.h.b16 %v97
    %v247 = vunpack.c.l.b16 %v98
    %v248 = vunpack.c.h.b16 %v98
    %v249 = vunpack.c.l.b16 %v99
    %v250 = vunpack.c.h.b16 %v99
    %v251 = vunpack.c.l.b16 %v100
    %v252 = vunpack.c.h.b16 %v100
    %v253 = vunpack.c.l.b16 %v101
    %v254 = vunpack.c.h.b16 %v101
    %v255 = vunpack.c.l.b16 %v102
    %v256 = vunpack.c.h.b16 %v102
    %v257 = vunpack.c.l.b16 %v103
    %v258 = vunpack.c.h.b16 %v103
    %v259 = vunpack.c.l.b16 %v104
    %v260 = vunpack.c.h.b16 %v104
    %v261 = vunpack.c.l.b16 %v105
    %v262 = vunpack.c.h.b16 %v105
    %v263 = vunpack.c.l.b16 %v106
    %v264 = vunpack.c.h.b16 %v106
    %v265 = vunpack.c.l.b16 %v107
    %v266 = vunpack.c.h.b16 %v107
    %v267 = vunpack.c.l.b16 %v108
    %v268 = vunpack.c.h.b16 %v108
    %v269 = vunpack.c.l.b16 %v109
    %v270 = vunpack.c.h.b16 %v109
    %v271 = vunpack.c.l.b16 %v110
    %v272 = vunpack.c.h.b16 %v110
    %v273 = vunpack.c.l.b16 %v111
    %v274 = vunpack.c.h.b16 %v111
    %v275 = vunpack.c.l.b16 %v112
    %v276 = vunpack.c.h.b16 %v112
    %v277 = vunpack.c.l.b16 %v113
    %v278 = vunpack.c.h.b16 %v113
    %v279 = vunpack.c.l.b16 %v114
    %v280 = vunpack.c.h.b16 %v114
    %v281 = vunpack.c.l.b16 %v115
    %v282 = vunpack.c.h.b16 %v115
    %v283 = vunpack.c.l.b16 %v116
    %v284 = vunpack.c.h.b16 %v116
    %v285 = vunpack.c.l.b16 %v117
    %v286 = vunpack.c.h.b16 %v117
    %v287 = vunpack.c.l.b16 %v118
    %v288 = vunpack.c.h.b16 %v118
    %v289 = vpack.c.b16 %v223, %v221
    %v290 = vpack.c.b16 %v224, %v222
    %v291 = vpack.c.b16 %v227, %v225
    %v292 = vpack.c.b16 %v228, %v226
    %v293 = vpack.c.b16 %v231, %v229
    %v294 = vpack.c.b16 %v232, %v230
    %v295 = vpack.c.b16 %v235, %v233
    %v296 = vpack.c.b16 %v236, %v234
    %v297 = vpack.c.b16 %v239, %v237
    %v298 = vpack.c.b16 %v240, %v238
    %v299 = vpack.c.b16 %v243, %v241
    %v300 = vpack.c.b16 %v244, %v242
    %v301 = vpack.c.b16 %v247, %v245
    %v302 = vpack.c.b16 %v248, %v246
    %v303 = vpack.c.b16 %v251, %v249
    %v304 = vpack.c.b16 %v252, %v250
    %v305 = vpack.c.b16 %v255, %v253
    %v306 = vpack.c.b16 %v256, %v254
    %v307 = vpack.c.b16 %v259, %v257
    %v308 = vpack.c.b16 %v260, %v258
    %v309 = vpack.c.b16 %v263, %v261
    %v310 = vpack.c.b16 %v264, %v262
    %v311 = vpack.c.b16 %v267, %v265
    %v312 = vpack.c.b16 %v268, %v266
    %v313 = vpack.c.b16 %v271, %v269
    %v314 = vpack.c.b16 %v272, %v270
    %v315 = vpack.c.b16 %v275, %v273
    %v316 = vpack.c.b16 %v276, %v274
    %v317 = vpack.c.b16 %v279, %v277
    %v318 = vpack.c.b16 %v280, %v278
    %v319 = vpack.c.b16 %v283, %v281
    %v320 = vpack.c.b16 %v284, %v282
    %v321 = vpack.c.b16 %v287, %v285
    %v322 = vpack.c.b16 %v288, %v286
    %357 = vxpose.xlu0.c.b16.start [1/8] %v289, 128
    %358 = vxpose.xlu0.c.b16.cont [2/8] %v291, 128
    %359 = vxpose.xlu0.c.b16.cont [3/8] %v293, 128
    %360 = vxpose.xlu0.c.b16.cont [4/8] %v295, 128
    %361 = vxpose.xlu0.c.b16.cont [5/8] %v297, 128
    %362 = vxpose.xlu0.c.b16.cont [6/8] %v299, 128
    %363 = vxpose.xlu0.c.b16.cont [7/8] %v301, 128
    %364 = vxpose.xlu0.c.b16.end [8/8] %v303, 128
    %v365 = vpop.trf.xlu0
    %v366 = vpop.trf.xlu0
    %v367 = vpop.trf.xlu0
    %v368 = vpop.trf.xlu0
    %v369 = vpop.trf.xlu0
    %v370 = vpop.trf.xlu0
    %v371 = vpop.trf.xlu0
    %v372 = vpop.trf.xlu0
    %373 = vxpose.xlu0.c.b16.start [1/8] %v290, 128
    %374 = vxpose.xlu0.c.b16.cont [2/8] %v292, 128
    %375 = vxpose.xlu0.c.b16.cont [3/8] %v294, 128
    %376 = vxpose.xlu0.c.b16.cont [4/8] %v296, 128
    %377 = vxpose.xlu0.c.b16.cont [5/8] %v298, 128
    %378 = vxpose.xlu0.c.b16.cont [6/8] %v300, 128
    %379 = vxpose.xlu0.c.b16.cont [7/8] %v302, 128
    %380 = vxpose.xlu0.c.b16.end [8/8] %v304, 128
    %v381 = vpop.trf.xlu0
    %v382 = vpop.trf.xlu0
    %v383 = vpop.trf.xlu0
    %v384 = vpop.trf.xlu0
    %v385 = vpop.trf.xlu0
    %v386 = vpop.trf.xlu0
    %v387 = vpop.trf.xlu0
    %v388 = vpop.trf.xlu0
    %389 = vxpose.xlu0.c.b16.start [1/8] %v305, 128
    %390 = vxpose.xlu0.c.b16.cont [2/8] %v307, 128
    %391 = vxpose.xlu0.c.b16.cont [3/8] %v309, 128
    %392 = vxpose.xlu0.c.b16.cont [4/8] %v311, 128
    %393 = vxpose.xlu0.c.b16.cont [5/8] %v313, 128
    %394 = vxpose.xlu0.c.b16.cont [6/8] %v315, 128
    %395 = vxpose.xlu0.c.b16.cont [7/8] %v317, 128
    %396 = vxpose.xlu0.c.b16.end [8/8] %v319, 128
    %v397 = vpop.trf.xlu0
    %v398 = vpop.trf.xlu0
    %v399 = vpop.trf.xlu0
    %v400 = vpop.trf.xlu0
    %v401 = vpop.trf.xlu0
    %v402 = vpop.trf.xlu0
    %v403 = vpop.trf.xlu0
    %v404 = vpop.trf.xlu0
    %405 = vxpose.xlu0.c.b16.start [1/8] %v306, 128
    %406 = vxpose.xlu0.c.b16.cont [2/8] %v308, 128
    %407 = vxpose.xlu0.c.b16.cont [3/8] %v310, 128
    %408 = vxpose.xlu0.c.b16.cont [4/8] %v312, 128
    %409 = vxpose.xlu0.c.b16.cont [5/8] %v314, 128
    %410 = vxpose.xlu0.c.b16.cont [6/8] %v316, 128
    %411 = vxpose.xlu0.c.b16.cont [7/8] %v318, 128
    %412 = vxpose.xlu0.c.b16.end [8/8] %v320, 128
    %v413 = vpop.trf.xlu0
    %v414 = vpop.trf.xlu0
    %v415 = vpop.trf.xlu0
    %v416 = vpop.trf.xlu0
    %v417 = vpop.trf.xlu0
    %v418 = vpop.trf.xlu0
    %v419 = vpop.trf.xlu0
    %v420 = vpop.trf.xlu0
    %421 = vxpose.xlu0.c.b16.start [1/8] %v321, 128
    %422 = vxpose.xlu0.c.b16.cont [2/8] 0, 128
    %423 = vxpose.xlu0.c.b16.cont [3/8] 0, 128
    %424 = vxpose.xlu0.c.b16.cont [4/8] 0, 128
    %425 = vxpose.xlu0.c.b16.cont [5/8] 0, 128
    %426 = vxpose.xlu0.c.b16.cont [6/8] 0, 128
    %427 = vxpose.xlu0.c.b16.cont [7/8] 0, 128
    %428 = vxpose.xlu0.c.b16.end [8/8] 0, 128
    %v429 = vpop.trf.xlu0
    %v430 = vpop.trf.xlu0
    %v431 = vpop.trf.xlu0
    %v432 = vpop.trf.xlu0
    %v433 = vpop.trf.xlu0
    %v434 = vpop.trf.xlu0
    %v435 = vpop.trf.xlu0
    %v436 = vpop.trf.xlu0
    %437 = vxpose.xlu0.c.b16.start [1/8] %v322, 128
    %438 = vxpose.xlu0.c.b16.cont [2/8] 0, 128
    %439 = vxpose.xlu0.c.b16.cont [3/8] 0, 128
    %440 = vxpose.xlu0.c.b16.cont [4/8] 0, 128
    %441 = vxpose.xlu0.c.b16.cont [5/8] 0, 128
    %442 = vxpose.xlu0.c.b16.cont [6/8] 0, 128
    %443 = vxpose.xlu0.c.b16.cont [7/8] 0, 128
    %444 = vxpose.xlu0.c.b16.end [8/8] 0, 128
    %v445 = vpop.trf.xlu0
    %v446 = vpop.trf.xlu0
    %v447 = vpop.trf.xlu0
    %v448 = vpop.trf.xlu0
    %v449 = vpop.trf.xlu0
    %v450 = vpop.trf.xlu0
    %v451 = vpop.trf.xlu0
    %v452 = vpop.trf.xlu0
    %v487 = vunpack.c.l.b16 %v153
    %v488 = vunpack.c.l.b16 %v154
    %v489 = vunpack.c.l.b16 %v155
    %v490 = vunpack.c.l.b16 %v156
    %v491 = vunpack.c.l.b16 %v157
    %v492 = vunpack.c.l.b16 %v158
    %v493 = vunpack.c.l.b16 %v159
    %v494 = vunpack.c.l.b16 %v160
    %v495 = vunpack.c.l.b16 %v161
    %v496 = vunpack.c.l.b16 %v162
    %v497 = vunpack.c.l.b16 %v163
    %v498 = vunpack.c.l.b16 %v164
    %v499 = vunpack.c.l.b16 %v165
    %v500 = vunpack.c.l.b16 %v166
    %v501 = vunpack.c.l.b16 %v167
    %v502 = vunpack.c.l.b16 %v168
    %v503 = vunpack.c.l.b16 %v169
    %v504 = vunpack.c.l.b16 %v170
    %v505 = vunpack.c.l.b16 %v171
    %v506 = vunpack.c.l.b16 %v172
    %v507 = vunpack.c.l.b16 %v173
    %v508 = vunpack.c.l.b16 %v174
    %v509 = vunpack.c.l.b16 %v175
    %v510 = vunpack.c.l.b16 %v176
    %v511 = vunpack.c.l.b16 %v177
    %v512 = vunpack.c.l.b16 %v178
    %v513 = vunpack.c.l.b16 %v179
    %v514 = vunpack.c.l.b16 %v180
    %v515 = vunpack.c.l.b16 %v181
    %v516 = vunpack.c.l.b16 %v182
    %v517 = vunpack.c.l.b16 %v183
    %v518 = vunpack.c.l.b16 %v184
    %v519 = vunpack.c.l.b16 %v185
    %v520 = vunpack.c.l.b16 %v186
    %v521 = vpack.c.b16 %v488, %v487
    %v522 = vpack.c.b16 %v490, %v489
    %v523 = vpack.c.b16 %v492, %v491
    %v524 = vpack.c.b16 %v494, %v493
    %v525 = vpack.c.b16 %v496, %v495
    %v526 = vpack.c.b16 %v498, %v497
    %v527 = vpack.c.b16 %v500, %v499
    %v528 = vpack.c.b16 %v502, %v501
    %v529 = vpack.c.b16 %v504, %v503
    %v530 = vpack.c.b16 %v506, %v505
    %v531 = vpack.c.b16 %v508, %v507
    %v532 = vpack.c.b16 %v510, %v509
    %v533 = vpack.c.b16 %v512, %v511
    %v534 = vpack.c.b16 %v514, %v513
    %v535 = vpack.c.b16 %v516, %v515
    %v536 = vpack.c.b16 %v518, %v517
    %v537 = vpack.c.b16 %v520, %v519
    %vm555 = vcmask 130048
    %v557 = vsel %vm555, %v429, 0
    %v560 = vsel %vm555, %v430, 0
    %v563 = vsel %vm555, %v431, 0
    %v566 = vsel %vm555, %v432, 0
    %v569 = vsel %vm555, %v433, 0
    %v572 = vsel %vm555, %v434, 0
    %v575 = vsel %vm555, %v435, 0
    %v578 = vsel %vm555, %v436, 0
    %v581 = vsel %vm555, %v445, 0
    %v584 = vsel %vm555, %v446, 0
    %v587 = vsel %vm555, %v447, 0
    %v590 = vsel %vm555, %v448, 0
    %v593 = vsel %vm555, %v449, 0
    %v596 = vsel %vm555, %v450, 0
    %v599 = vsel %vm555, %v451, 0
    %v602 = vsel %vm555, %v452, 0
    %604 = vmatprep.subr.bf16.mxu0 0
    %605 = vmatpush1.bf16.msra.mxu0 %v521
    %606 = vmatprep.subr.bf16.mxu0 0
    %607 = vmatpush1.bf16.msra.mxu0 %v522
    %608 = vmatprep.subr.bf16.mxu0 0
    %609 = vmatpush1.bf16.msra.mxu0 %v523
    %610 = vmatprep.subr.bf16.mxu0 0
    %611 = vmatpush1.bf16.msra.mxu0 %v524
    %612 = vmatprep.subr.bf16.mxu0 0
    %613 = vmatpush1.bf16.msra.mxu0 %v525
    %614 = vmatprep.subr.bf16.mxu0 0
    %615 = vmatpush1.bf16.msra.mxu0 %v526
    %616 = vmatprep.subr.bf16.mxu0 0
    %617 = vmatpush1.bf16.msra.mxu0 %v527
    %618 = vmatprep.subr.bf16.mxu0 0
    %619 = vmatpush1.bf16.msra.mxu0 %v528
    %620 = vmatprep.subr.bf16.mxu0 0
    %621 = vmatpush1.bf16.msra.mxu0 %v529
    %622 = vmatprep.subr.bf16.mxu0 0
    %623 = vmatpush1.bf16.msra.mxu0 %v530
    %624 = vmatprep.subr.bf16.mxu0 0
    %625 = vmatpush1.bf16.msra.mxu0 %v531
    %626 = vmatprep.subr.bf16.mxu0 0
    %627 = vmatpush1.bf16.msra.mxu0 %v532
    %628 = vmatprep.subr.bf16.mxu0 0
    %629 = vmatpush1.bf16.msra.mxu0 %v533
    %630 = vmatprep.subr.bf16.mxu0 0
    %631 = vmatpush1.bf16.msra.mxu0 %v534
    %632 = vmatprep.subr.bf16.mxu0 0
    %633 = vmatpush1.bf16.msra.mxu0 %v535
    %634 = vmatprep.subr.bf16.mxu0 0
    %635 = vmatpush1.bf16.msra.mxu0 %v536
    %636 = vmatprep.mubr.bf16.mxu0 %v397
    %637 = vmatmul.mubr.bf16.gmra.mrb[0].mxu0 %v365
    %v638 = vpop.f32.mrb[0].mxu0
    %v639 = vadd.f32 0.0, %v638
    %v640 = vpop.f32.mrb[0].mxu0
    %v641 = vpop.f32.mrb[0].mxu0
    %v642 = vadd.f32 0.0, %v641
    %v643 = vpop.f32.mrb[0].mxu0
    %644 = vmatprep.mubr.bf16.mxu0 %v398
    %645 = vmatmul.mubr.bf16.gmra.mrb[0].mxu0 %v366
    %v646 = vpop.f32.mrb[0].mxu0
    %v647 = vadd.f32 0.0, %v646
    %v648 = vpop.f32.mrb[0].mxu0
    %v649 = vpop.f32.mrb[0].mxu0
    %v650 = vadd.f32 0.0, %v649
    %v651 = vpop.f32.mrb[0].mxu0
    %652 = vmatprep.mubr.bf16.mxu0 %v399
    %653 = vmatmul.mubr.bf16.gmra.mrb[0].mxu0 %v367
    %v654 = vpop.f32.mrb[0].mxu0
    %v655 = vadd.f32 0.0, %v654
    %v656 = vpop.f32.mrb[0].mxu0
    %v657 = vpop.f32.mrb[0].mxu0
    %v658 = vadd.f32 0.0, %v657
    %v659 = vpop.f32.mrb[0].mxu0
    %660 = vmatprep.mubr.bf16.mxu0 %v400
    %661 = vmatmul.mubr.bf16.gmra.mrb[0].mxu0 %v368
    %v662 = vpop.f32.mrb[0].mxu0
    %v663 = vadd.f32 0.0, %v662
    %v664 = vpop.f32.mrb[0].mxu0
    %v665 = vpop.f32.mrb[0].mxu0
    %v666 = vadd.f32 0.0, %v665
    %v667 = vpop.f32.mrb[0].mxu0
    %668 = vmatprep.mubr.bf16.mxu0 %v401
    %669 = vmatmul.mubr.bf16.gmra.mrb[0].mxu0 %v369
    %v670 = vpop.f32.mrb[0].mxu0
    %v671 = vadd.f32 0.0, %v670
    %v672 = vpop.f32.mrb[0].mxu0
    %v673 = vpop.f32.mrb[0].mxu0
    %v674 = vadd.f32 0.0, %v673
    %v675 = vpop.f32.mrb[0].mxu0
    %676 = vmatprep.mubr.bf16.mxu0 %v402
    %677 = vmatmul.mubr.bf16.gmra.mrb[0].mxu0 %v370
    %v678 = vpop.f32.mrb[0].mxu0
    %v679 = vadd.f32 0.0, %v678
    %v680 = vpop.f32.mrb[0].mxu0
    %v681 = vpop.f32.mrb[0].mxu0
    %v682 = vadd.f32 0.0, %v681
    %v683 = vpop.f32.mrb[0].mxu0
    %684 = vmatprep.mubr.bf16.mxu0 %v403
    %685 = vmatmul.mubr.bf16.gmra.mrb[0].mxu0 %v371
    %v686 = vpop.f32.mrb[0].mxu0
    %v687 = vadd.f32 0.0, %v686
    %v688 = vpop.f32.mrb[0].mxu0
    %v689 = vpop.f32.mrb[0].mxu0
    %v690 = vadd.f32 0.0, %v689
    %v691 = vpop.f32.mrb[0].mxu0
    %692 = vmatprep.mubr.bf16.mxu0 %v404
    %693 = vmatmul.mubr.bf16.gmra.mrb[0].mxu0 %v372
    %v694 = vpop.f32.mrb[0].mxu0
    %v695 = vadd.f32 0.0, %v694
    %v696 = vpop.f32.mrb[0].mxu0
    %v697 = vpop.f32.mrb[0].mxu0
    %v698 = vadd.f32 0.0, %v697
    %v699 = vpop.f32.mrb[0].mxu0
    %700 = vmatprep.mubr.bf16.mxu0 %v413
    %701 = vmatmul.mubr.bf16.gmra.mrb[0].mxu0 %v381
    %v702 = vpop.f32.mrb[0].mxu0
    %v703 = vadd.f32 0.0, %v702
    %v704 = vpop.f32.mrb[0].mxu0
    %v705 = vpop.f32.mrb[0].mxu0
    %v706 = vadd.f32 0.0, %v705
    %v707 = vpop.f32.mrb[0].mxu0
    %708 = vmatprep.mubr.bf16.mxu0 %v414
    %709 = vmatmul.mubr.bf16.gmra.mrb[0].mxu0 %v382
    %v710 = vpop.f32.mrb[0].mxu0
    %v711 = vadd.f32 0.0, %v710
    %v712 = vpop.f32.mrb[0].mxu0
    %v713 = vpop.f32.mrb[0].mxu0
    %v714 = vadd.f32 0.0, %v713
    %v715 = vpop.f32.mrb[0].mxu0
    %716 = vmatprep.mubr.bf16.mxu0 %v415
    %717 = vmatmul.mubr.bf16.gmra.mrb[0].mxu0 %v383
    %v718 = vpop.f32.mrb[0].mxu0
    %v719 = vadd.f32 0.0, %v718
    %v720 = vpop.f32.mrb[0].mxu0
    %v721 = vpop.f32.mrb[0].mxu0
    %v722 = vadd.f32 0.0, %v721
    %v723 = vpop.f32.mrb[0].mxu0
    %724 = vmatprep.mubr.bf16.mxu0 %v416
    %725 = vmatmul.mubr.bf16.gmra.mrb[0].mxu0 %v384
    %v726 = vpop.f32.mrb[0].mxu0
    %v727 = vadd.f32 0.0, %v726
    %v728 = vpop.f32.mrb[0].mxu0
    %v729 = vpop.f32.mrb[0].mxu0
    %v730 = vadd.f32 0.0, %v729
    %v731 = vpop.f32.mrb[0].mxu0
    %732 = vmatprep.mubr.bf16.mxu0 %v417
    %733 = vmatmul.mubr.bf16.gmra.mrb[0].mxu0 %v385
    %v734 = vpop.f32.mrb[0].mxu0
    %v735 = vadd.f32 0.0, %v734
    %v736 = vpop.f32.mrb[0].mxu0
    %v737 = vpop.f32.mrb[0].mxu0
    %v738 = vadd.f32 0.0, %v737
    %v739 = vpop.f32.mrb[0].mxu0
    %740 = vmatprep.mubr.bf16.mxu0 %v418
    %741 = vmatmul.mubr.bf16.gmra.mrb[0].mxu0 %v386
    %v742 = vpop.f32.mrb[0].mxu0
    %v743 = vadd.f32 0.0, %v742
    %v744 = vpop.f32.mrb[0].mxu0
    %v745 = vpop.f32.mrb[0].mxu0
    %v746 = vadd.f32 0.0, %v745
    %v747 = vpop.f32.mrb[0].mxu0
    %748 = vmatprep.mubr.bf16.mxu0 %v419
    %749 = vmatmul.mubr.bf16.gmra.mrb[0].mxu0 %v387
    %v750 = vpop.f32.mrb[0].mxu0
    %v751 = vadd.f32 0.0, %v750
    %v752 = vpop.f32.mrb[0].mxu0
    %v753 = vpop.f32.mrb[0].mxu0
    %v754 = vadd.f32 0.0, %v753
    %v755 = vpop.f32.mrb[0].mxu0
    %756 = vmatprep.mubr.bf16.mxu0 %v420
    %757 = vmatmul.mubr.bf16.gmra.mrb[0].mxu0 %v388
    %v758 = vpop.f32.mrb[0].mxu0
    %v759 = vadd.f32 0.0, %v758
    %v760 = vpop.f32.mrb[0].mxu0
    %v761 = vpop.f32.mrb[0].mxu0
    %v762 = vadd.f32 0.0, %v761
    %v763 = vpop.f32.mrb[0].mxu0
    %764 = vdwg.mxu0
    %765 = vmatprep.subr.bf16.mxu0 0
    %766 = vmatpush1.bf16.msra.mxu0 %v537
    %767 = vmatprep.subr.bf16.mxu0 0
    %768 = vmatpush1.bf16.msra.mxu0 0
    %769 = vmatprep.subr.bf16.mxu0 0
    %770 = vmatpush1.bf16.msra.mxu0 0
    %771 = vmatprep.subr.bf16.mxu0 0
    %772 = vmatpush1.bf16.msra.mxu0 0
    %773 = vmatprep.subr.bf16.mxu0 0
    %774 = vmatpush1.bf16.msra.mxu0 0
    %775 = vmatprep.subr.bf16.mxu0 0
    %776 = vmatpush1.bf16.msra.mxu0 0
    %777 = vmatprep.subr.bf16.mxu0 0
    %778 = vmatpush1.bf16.msra.mxu0 0
    %779 = vmatprep.subr.bf16.mxu0 0
    %780 = vmatpush1.bf16.msra.mxu0 0
    %781 = vmatprep.subr.bf16.mxu0 0
    %782 = vmatpush1.bf16.msra.mxu0 0
    %783 = vmatprep.subr.bf16.mxu0 0
    %784 = vmatpush1.bf16.msra.mxu0 0
    %785 = vmatprep.subr.bf16.mxu0 0
    %786 = vmatpush1.bf16.msra.mxu0 0
    %787 = vmatprep.subr.bf16.mxu0 0
    %788 = vmatpush1.bf16.msra.mxu0 0
    %789 = vmatprep.subr.bf16.mxu0 0
    %790 = vmatpush1.bf16.msra.mxu0 0
    %791 = vmatprep.subr.bf16.mxu0 0
    %792 = vmatpush1.bf16.msra.mxu0 0
    %793 = vmatprep.subr.bf16.mxu0 0
    %794 = vmatpush1.bf16.msra.mxu0 0
    %795 = vmatprep.subr.bf16.mxu0 0
    %796 = vmatpush1.bf16.msra.mxu0 0
    %797 = vmatprep.mubr.bf16.mxu0 0
    %798 = vmatmul.mubr.bf16.gmra.mrb[0].mxu0 %v557
    %v799 = vpop.f32.mrb[0].mxu0
    %v800 = vadd.f32 %v639, %v799
    %v801 = vpop.f32.mrb[0].mxu0
    %v802 = vpop.f32.mrb[0].mxu0
    %v803 = vadd.f32 %v642, %v802
    %v804 = vpop.f32.mrb[0].mxu0
    %805 = vmatprep.mubr.bf16.mxu0 0
    %806 = vmatmul.mubr.bf16.gmra.mrb[0].mxu0 %v560
    %v807 = vpop.f32.mrb[0].mxu0
    %v808 = vadd.f32 %v647, %v807
    %v809 = vpop.f32.mrb[0].mxu0
    %v810 = vpop.f32.mrb[0].mxu0
    %v811 = vadd.f32 %v650, %v810
    %v812 = vpop.f32.mrb[0].mxu0
    %813 = vmatprep.mubr.bf16.mxu0 0
    %814 = vmatmul.mubr.bf16.gmra.mrb[0].mxu0 %v563
    %v815 = vpop.f32.mrb[0].mxu0
    %v816 = vadd.f32 %v655, %v815
    %v817 = vpop.f32.mrb[0].mxu0
    %v818 = vpop.f32.mrb[0].mxu0
    %v819 = vadd.f32 %v658, %v818
    %v820 = vpop.f32.mrb[0].mxu0
    %821 = vmatprep.mubr.bf16.mxu0 0
    %822 = vmatmul.mubr.bf16.gmra.mrb[0].mxu0 %v566
    %v823 = vpop.f32.mrb[0].mxu0
    %v824 = vadd.f32 %v663, %v823
    %v825 = vpop.f32.mrb[0].mxu0
    %v826 = vpop.f32.mrb[0].mxu0
    %v827 = vadd.f32 %v666, %v826
    %v828 = vpop.f32.mrb[0].mxu0
    %829 = vmatprep.mubr.bf16.mxu0 0
    %830 = vmatmul.mubr.bf16.gmra.mrb[0].mxu0 %v569
    %v831 = vpop.f32.mrb[0].mxu0
    %v832 = vadd.f32 %v671, %v831
    %v833 = vpop.f32.mrb[0].mxu0
    %v834 = vpop.f32.mrb[0].mxu0
    %v835 = vadd.f32 %v674, %v834
    %v836 = vpop.f32.mrb[0].mxu0
    %837 = vmatprep.mubr.bf16.mxu0 0
    %838 = vmatmul.mubr.bf16.gmra.mrb[0].mxu0 %v572
    %v839 = vpop.f32.mrb[0].mxu0
    %v840 = vadd.f32 %v679, %v839
    %v841 = vpop.f32.mrb[0].mxu0
    %v842 = vpop.f32.mrb[0].mxu0
    %v843 = vadd.f32 %v682, %v842
    %v844 = vpop.f32.mrb[0].mxu0
    %845 = vmatprep.mubr.bf16.mxu0 0
    %846 = vmatmul.mubr.bf16.gmra.mrb[0].mxu0 %v575
    %v847 = vpop.f32.mrb[0].mxu0
    %v848 = vadd.f32 %v687, %v847
    %v849 = vpop.f32.mrb[0].mxu0
    %v850 = vpop.f32.mrb[0].mxu0
    %v851 = vadd.f32 %v690, %v850
    %v852 = vpop.f32.mrb[0].mxu0
    %853 = vmatprep.mubr.bf16.mxu0 0
    %854 = vmatmul.mubr.bf16.gmra.mrb[0].mxu0 %v578
    %v855 = vpop.f32.mrb[0].mxu0
    %v856 = vadd.f32 %v695, %v855
    %v857 = vpop.f32.mrb[0].mxu0
    %v858 = vpop.f32.mrb[0].mxu0
    %v859 = vadd.f32 %v698, %v858
    %v860 = vpop.f32.mrb[0].mxu0
    %861 = vmatprep.mubr.bf16.mxu0 0
    %862 = vmatmul.mubr.bf16.gmra.mrb[0].mxu0 %v581
    %v863 = vpop.f32.mrb[0].mxu0
    %v864 = vadd.f32 %v703, %v863
    %v865 = vpop.f32.mrb[0].mxu0
    %v866 = vpop.f32.mrb[0].mxu0
    %v867 = vadd.f32 %v706, %v866
    %v868 = vpop.f32.mrb[0].mxu0
    %869 = vmatprep.mubr.bf16.mxu0 0
    %870 = vmatmul.mubr.bf16.gmra.mrb[0].mxu0 %v584
    %v871 = vpop.f32.mrb[0].mxu0
    %v872 = vadd.f32 %v711, %v871
    %v873 = vpop.f32.mrb[0].mxu0
    %v874 = vpop.f32.mrb[0].mxu0
    %v875 = vadd.f32 %v714, %v874
    %v876 = vpop.f32.mrb[0].mxu0
    %877 = vmatprep.mubr.bf16.mxu0 0
    %878 = vmatmul.mubr.bf16.gmra.mrb[0].mxu0 %v587
    %v879 = vpop.f32.mrb[0].mxu0
    %v880 = vadd.f32 %v719, %v879
    %v881 = vpop.f32.mrb[0].mxu0
    %v882 = vpop.f32.mrb[0].mxu0
    %v883 = vadd.f32 %v722, %v882
    %v884 = vpop.f32.mrb[0].mxu0
    %885 = vmatprep.mubr.bf16.mxu0 0
    %886 = vmatmul.mubr.bf16.gmra.mrb[0].mxu0 %v590
    %v887 = vpop.f32.mrb[0].mxu0
    %v888 = vadd.f32 %v727, %v887
    %v889 = vpop.f32.mrb[0].mxu0
    %v890 = vpop.f32.mrb[0].mxu0
    %v891 = vadd.f32 %v730, %v890
    %v892 = vpop.f32.mrb[0].mxu0
    %893 = vmatprep.mubr.bf16.mxu0 0
    %894 = vmatmul.mubr.bf16.gmra.mrb[0].mxu0 %v593
    %v895 = vpop.f32.mrb[0].mxu0
    %v896 = vadd.f32 %v735, %v895
    %v897 = vpop.f32.mrb[0].mxu0
    %v898 = vpop.f32.mrb[0].mxu0
    %v899 = vadd.f32 %v738, %v898
    %v900 = vpop.f32.mrb[0].mxu0
    %901 = vmatprep.mubr.bf16.mxu0 0
    %902 = vmatmul.mubr.bf16.gmra.mrb[0].mxu0 %v596
    %v903 = vpop.f32.mrb[0].mxu0
    %v904 = vadd.f32 %v743, %v903
    %v905 = vpop.f32.mrb[0].mxu0
    %v906 = vpop.f32.mrb[0].mxu0
    %v907 = vadd.f32 %v746, %v906
    %v908 = vpop.f32.mrb[0].mxu0
    %909 = vmatprep.mubr.bf16.mxu0 0
    %910 = vmatmul.mubr.bf16.gmra.mrb[0].mxu0 %v599
    %v911 = vpop.f32.mrb[0].mxu0
    %v912 = vadd.f32 %v751, %v911
    %v913 = vpop.f32.mrb[0].mxu0
    %v914 = vpop.f32.mrb[0].mxu0
    %v915 = vadd.f32 %v754, %v914
    %v916 = vpop.f32.mrb[0].mxu0
    %917 = vmatprep.mubr.bf16.mxu0 0
    %918 = vmatmul.mubr.bf16.gmra.mrb[0].mxu0 %v602
    %v919 = vpop.f32.mrb[0].mxu0
    %v920 = vadd.f32 %v759, %v919
    %v921 = vpop.f32.mrb[0].mxu0
    %v922 = vpop.f32.mrb[0].mxu0
    %v923 = vadd.f32 %v762, %v922
    %v924 = vpop.f32.mrb[0].mxu0
    %925 = vdwg.mxu0
    %v960 = vunpack.c.l.b16 %v119
    %v961 = vunpack.c.l.b16 %v120
    %v962 = vunpack.c.l.b16 %v121
    %v963 = vunpack.c.l.b16 %v122
    %v964 = vunpack.c.l.b16 %v123
    %v965 = vunpack.c.l.b16 %v124
    %v966 = vunpack.c.l.b16 %v125
    %v967 = vunpack.c.l.b16 %v126
    %v968 = vunpack.c.l.b16 %v127
    %v969 = vunpack.c.l.b16 %v128
    %v970 = vunpack.c.l.b16 %v129
    %v971 = vunpack.c.l.b16 %v130
    %v972 = vunpack.c.l.b16 %v131
    %v973 = vunpack.c.l.b16 %v132
    %v974 = vunpack.c.l.b16 %v133
    %v975 = vunpack.c.l.b16 %v134
    %v976 = vunpack.c.l.b16 %v135
    %v977 = vunpack.c.l.b16 %v136
    %v978 = vunpack.c.l.b16 %v137
    %v979 = vunpack.c.l.b16 %v138
    %v980 = vunpack.c.l.b16 %v139
    %v981 = vunpack.c.l.b16 %v140
    %v982 = vunpack.c.l.b16 %v141
    %v983 = vunpack.c.l.b16 %v142
    %v984 = vunpack.c.l.b16 %v143
    %v985 = vunpack.c.l.b16 %v144
    %v986 = vunpack.c.l.b16 %v145
    %v987 = vunpack.c.l.b16 %v146
    %v988 = vunpack.c.l.b16 %v147
    %v989 = vunpack.c.l.b16 %v148
    %v990 = vunpack.c.l.b16 %v149
    %v991 = vunpack.c.l.b16 %v150
    %v992 = vunpack.c.l.b16 %v151
    %v993 = vunpack.c.l.b16 %v152
    %v994 = vpack.c.b16 %v961, %v960
    %v995 = vpack.c.b16 %v963, %v962
    %v996 = vpack.c.b16 %v965, %v964
    %v997 = vpack.c.b16 %v967, %v966
    %v998 = vpack.c.b16 %v969, %v968
    %v999 = vpack.c.b16 %v971, %v970
    %v1000 = vpack.c.b16 %v973, %v972
    %v1001 = vpack.c.b16 %v975, %v974
    %v1002 = vpack.c.b16 %v977, %v976
    %v1003 = vpack.c.b16 %v979, %v978
    %v1004 = vpack.c.b16 %v981, %v980
    %v1005 = vpack.c.b16 %v983, %v982
    %v1006 = vpack.c.b16 %v985, %v984
    %v1007 = vpack.c.b16 %v987, %v986
    %v1008 = vpack.c.b16 %v989, %v988
    %v1009 = vpack.c.b16 %v991, %v990
    %v1010 = vpack.c.b16 %v993, %v992
    %1028 = vmatprep.subr.bf16.mxu0 0
    %1029 = vmatpush1.bf16.msra.mxu0 %v994
    %1030 = vmatprep.subr.bf16.mxu0 0
    %1031 = vmatpush1.bf16.msra.mxu0 %v995
    %1032 = vmatprep.subr.bf16.mxu0 0
    %1033 = vmatpush1.bf16.msra.mxu0 %v996
    %1034 = vmatprep.subr.bf16.mxu0 0
    %1035 = vmatpush1.bf16.msra.mxu0 %v997
    %1036 = vmatprep.subr.bf16.mxu0 0
    %1037 = vmatpush1.bf16.msra.mxu0 %v998
    %1038 = vmatprep.subr.bf16.mxu0 0
    %1039 = vmatpush1.bf16.msra.mxu0 %v999
    %1040 = vmatprep.subr.bf16.mxu0 0
    %1041 = vmatpush1.bf16.msra.mxu0 %v1000
    %1042 = vmatprep.subr.bf16.mxu0 0
    %1043 = vmatpush1.bf16.msra.mxu0 %v1001
    %1044 = vmatprep.subr.bf16.mxu0 0
    %1045 = vmatpush1.bf16.msra.mxu0 %v1002
    %1046 = vmatprep.subr.bf16.mxu0 0
    %1047 = vmatpush1.bf16.msra.mxu0 %v1003
    %1048 = vmatprep.subr.bf16.mxu0 0
    %1049 = vmatpush1.bf16.msra.mxu0 %v1004
    %1050 = vmatprep.subr.bf16.mxu0 0
    %1051 = vmatpush1.bf16.msra.mxu0 %v1005
    %1052 = vmatprep.subr.bf16.mxu0 0
    %1053 = vmatpush1.bf16.msra.mxu0 %v1006
    %1054 = vmatprep.subr.bf16.mxu0 0
    %1055 = vmatpush1.bf16.msra.mxu0 %v1007
    %1056 = vmatprep.subr.bf16.mxu0 0
    %1057 = vmatpush1.bf16.msra.mxu0 %v1008
    %1058 = vmatprep.subr.bf16.mxu0 0
    %1059 = vmatpush1.bf16.msra.mxu0 %v1009
    %1060 = vmatprep.mubr.bf16.mxu0 %v397
    %1061 = vmatmul.mubr.bf16.gmra.mrb[0].mxu0 %v365
    %v1062 = vpop.f32.mrb[0].mxu0
    %v1063 = vadd.f32 %v800, %v1062
    %v1064 = vpop.f32.mrb[0].mxu0
    %v1065 = vpop.f32.mrb[0].mxu0
    %v1066 = vadd.f32 %v803, %v1065
    %v1067 = vpop.f32.mrb[0].mxu0
    %1068 = vmatprep.mubr.bf16.mxu0 %v398
    %1069 = vmatmul.mubr.bf16.gmra.mrb[0].mxu0 %v366
    %v1070 = vpop.f32.mrb[0].mxu0
    %v1071 = vadd.f32 %v808, %v1070
    %v1072 = vpop.f32.mrb[0].mxu0
    %v1073 = vpop.f32.mrb[0].mxu0
    %v1074 = vadd.f32 %v811, %v1073
    %v1075 = vpop.f32.mrb[0].mxu0
    %1076 = vmatprep.mubr.bf16.mxu0 %v399
    %1077 = vmatmul.mubr.bf16.gmra.mrb[0].mxu0 %v367
    %v1078 = vpop.f32.mrb[0].mxu0
    %v1079 = vadd.f32 %v816, %v1078
    %v1080 = vpop.f32.mrb[0].mxu0
    %v1081 = vpop.f32.mrb[0].mxu0
    %v1082 = vadd.f32 %v819, %v1081
    %v1083 = vpop.f32.mrb[0].mxu0
    %1084 = vmatprep.mubr.bf16.mxu0 %v400
    %1085 = vmatmul.mubr.bf16.gmra.mrb[0].mxu0 %v368
    %v1086 = vpop.f32.mrb[0].mxu0
    %v1087 = vadd.f32 %v824, %v1086
    %v1088 = vpop.f32.mrb[0].mxu0
    %v1089 = vpop.f32.mrb[0].mxu0
    %v1090 = vadd.f32 %v827, %v1089
    %v1091 = vpop.f32.mrb[0].mxu0
    %1092 = vmatprep.mubr.bf16.mxu0 %v401
    %1093 = vmatmul.mubr.bf16.gmra.mrb[0].mxu0 %v369
    %v1094 = vpop.f32.mrb[0].mxu0
    %v1095 = vadd.f32 %v832, %v1094
    %v1096 = vpop.f32.mrb[0].mxu0
    %v1097 = vpop.f32.mrb[0].mxu0
    %v1098 = vadd.f32 %v835, %v1097
    %v1099 = vpop.f32.mrb[0].mxu0
    %1100 = vmatprep.mubr.bf16.mxu0 %v402
    %1101 = vmatmul.mubr.bf16.gmra.mrb[0].mxu0 %v370
    %v1102 = vpop.f32.mrb[0].mxu0
    %v1103 = vadd.f32 %v840, %v1102
    %v1104 = vpop.f32.mrb[0].mxu0
    %v1105 = vpop.f32.mrb[0].mxu0
    %v1106 = vadd.f32 %v843, %v1105
    %v1107 = vpop.f32.mrb[0].mxu0
    %1108 = vmatprep.mubr.bf16.mxu0 %v403
    %1109 = vmatmul.mubr.bf16.gmra.mrb[0].mxu0 %v371
    %v1110 = vpop.f32.mrb[0].mxu0
    %v1111 = vadd.f32 %v848, %v1110
    %v1112 = vpop.f32.mrb[0].mxu0
    %v1113 = vpop.f32.mrb[0].mxu0
    %v1114 = vadd.f32 %v851, %v1113
    %v1115 = vpop.f32.mrb[0].mxu0
    %1116 = vmatprep.mubr.bf16.mxu0 %v404
    %1117 = vmatmul.mubr.bf16.gmra.mrb[0].mxu0 %v372
    %v1118 = vpop.f32.mrb[0].mxu0
    %v1119 = vadd.f32 %v856, %v1118
    %v1120 = vpop.f32.mrb[0].mxu0
    %v1121 = vpop.f32.mrb[0].mxu0
    %v1122 = vadd.f32 %v859, %v1121
    %v1123 = vpop.f32.mrb[0].mxu0
    %1124 = vmatprep.mubr.bf16.mxu0 %v413
    %1125 = vmatmul.mubr.bf16.gmra.mrb[0].mxu0 %v381
    %v1126 = vpop.f32.mrb[0].mxu0
    %v1127 = vadd.f32 %v864, %v1126
    %v1128 = vpop.f32.mrb[0].mxu0
    %v1129 = vpop.f32.mrb[0].mxu0
    %v1130 = vadd.f32 %v867, %v1129
    %v1131 = vpop.f32.mrb[0].mxu0
    %1132 = vmatprep.mubr.bf16.mxu0 %v414
    %1133 = vmatmul.mubr.bf16.gmra.mrb[0].mxu0 %v382
    %v1134 = vpop.f32.mrb[0].mxu0
    %v1135 = vadd.f32 %v872, %v1134
    %v1136 = vpop.f32.mrb[0].mxu0
    %v1137 = vpop.f32.mrb[0].mxu0
    %v1138 = vadd.f32 %v875, %v1137
    %v1139 = vpop.f32.mrb[0].mxu0
    %1140 = vmatprep.mubr.bf16.mxu0 %v415
    %1141 = vmatmul.mubr.bf16.gmra.mrb[0].mxu0 %v383
    %v1142 = vpop.f32.mrb[0].mxu0
    %v1143 = vadd.f32 %v880, %v1142
    %v1144 = vpop.f32.mrb[0].mxu0
    %v1145 = vpop.f32.mrb[0].mxu0
    %v1146 = vadd.f32 %v883, %v1145
    %v1147 = vpop.f32.mrb[0].mxu0
    %1148 = vmatprep.mubr.bf16.mxu0 %v416
    %1149 = vmatmul.mubr.bf16.gmra.mrb[0].mxu0 %v384
    %v1150 = vpop.f32.mrb[0].mxu0
    %v1151 = vadd.f32 %v888, %v1150
    %v1152 = vpop.f32.mrb[0].mxu0
    %v1153 = vpop.f32.mrb[0].mxu0
    %v1154 = vadd.f32 %v891, %v1153
    %v1155 = vpop.f32.mrb[0].mxu0
    %1156 = vmatprep.mubr.bf16.mxu0 %v417
    %1157 = vmatmul.mubr.bf16.gmra.mrb[0].mxu0 %v385
    %v1158 = vpop.f32.mrb[0].mxu0
    %v1159 = vadd.f32 %v896, %v1158
    %v1160 = vpop.f32.mrb[0].mxu0
    %v1161 = vpop.f32.mrb[0].mxu0
    %v1162 = vadd.f32 %v899, %v1161
    %v1163 = vpop.f32.mrb[0].mxu0
    %1164 = vmatprep.mubr.bf16.mxu0 %v418
    %1165 = vmatmul.mubr.bf16.gmra.mrb[0].mxu0 %v386
    %v1166 = vpop.f32.mrb[0].mxu0
    %v1167 = vadd.f32 %v904, %v1166
    %v1168 = vpop.f32.mrb[0].mxu0
    %v1169 = vpop.f32.mrb[0].mxu0
    %v1170 = vadd.f32 %v907, %v1169
    %v1171 = vpop.f32.mrb[0].mxu0
    %1172 = vmatprep.mubr.bf16.mxu0 %v419
    %1173 = vmatmul.mubr.bf16.gmra.mrb[0].mxu0 %v387
    %v1174 = vpop.f32.mrb[0].mxu0
    %v1175 = vadd.f32 %v912, %v1174
    %v1176 = vpop.f32.mrb[0].mxu0
    %v1177 = vpop.f32.mrb[0].mxu0
    %v1178 = vadd.f32 %v915, %v1177
    %v1179 = vpop.f32.mrb[0].mxu0
    %1180 = vmatprep.mubr.bf16.mxu0 %v420
    %1181 = vmatmul.mubr.bf16.gmra.mrb[0].mxu0 %v388
    %v1182 = vpop.f32.mrb[0].mxu0
    %v1183 = vadd.f32 %v920, %v1182
    %v1184 = vpop.f32.mrb[0].mxu0
    %v1185 = vpop.f32.mrb[0].mxu0
    %v1186 = vadd.f32 %v923, %v1185
    %v1187 = vpop.f32.mrb[0].mxu0
    %1188 = vdwg.mxu0
    %1189 = vmatprep.subr.bf16.mxu0 0
    %1190 = vmatpush1.bf16.msra.mxu0 %v1010
    %1191 = vmatprep.subr.bf16.mxu0 0
    %1192 = vmatpush1.bf16.msra.mxu0 0
    %1193 = vmatprep.subr.bf16.mxu0 0
    %1194 = vmatpush1.bf16.msra.mxu0 0
    %1195 = vmatprep.subr.bf16.mxu0 0
    %1196 = vmatpush1.bf16.msra.mxu0 0
    %1197 = vmatprep.subr.bf16.mxu0 0
    %1198 = vmatpush1.bf16.msra.mxu0 0
    %1199 = vmatprep.subr.bf16.mxu0 0
    %1200 = vmatpush1.bf16.msra.mxu0 0
    %1201 = vmatprep.subr.bf16.mxu0 0
    %1202 = vmatpush1.bf16.msra.mxu0 0
    %1203 = vmatprep.subr.bf16.mxu0 0
    %1204 = vmatpush1.bf16.msra.mxu0 0
    %1205 = vmatprep.subr.bf16.mxu0 0
    %1206 = vmatpush1.bf16.msra.mxu0 0
    %1207 = vmatprep.subr.bf16.mxu0 0
    %1208 = vmatpush1.bf16.msra.mxu0 0
    %1209 = vmatprep.subr.bf16.mxu0 0
    %1210 = vmatpush1.bf16.msra.mxu0 0
    %1211 = vmatprep.subr.bf16.mxu0 0
    %1212 = vmatpush1.bf16.msra.mxu0 0
    %1213 = vmatprep.subr.bf16.mxu0 0
    %1214 = vmatpush1.bf16.msra.mxu0 0
    %1215 = vmatprep.subr.bf16.mxu0 0
    %1216 = vmatpush1.bf16.msra.mxu0 0
    %1217 = vmatprep.subr.bf16.mxu0 0
    %1218 = vmatpush1.bf16.msra.mxu0 0
    %1219 = vmatprep.subr.bf16.mxu0 0
    %1220 = vmatpush1.bf16.msra.mxu0 0
    %1221 = vmatprep.mubr.bf16.mxu0 0
    %1222 = vmatmul.mubr.bf16.gmra.mrb[0].mxu0 %v557
    %v1223 = vpop.f32.mrb[0].mxu0
    %v1224 = vadd.f32 %v1063, %v1223
    %v1225 = vpop.f32.mrb[0].mxu0
    %v1226 = vpop.f32.mrb[0].mxu0
    %v1227 = vadd.f32 %v1066, %v1226
    %v1228 = vpop.f32.mrb[0].mxu0
    %1229 = vmatprep.mubr.bf16.mxu0 0
    %1230 = vmatmul.mubr.bf16.gmra.mrb[0].mxu0 %v560
    %v1231 = vpop.f32.mrb[0].mxu0
    %v1232 = vadd.f32 %v1071, %v1231
    %v1233 = vpop.f32.mrb[0].mxu0
    %v1234 = vpop.f32.mrb[0].mxu0
    %v1235 = vadd.f32 %v1074, %v1234
    %v1236 = vpop.f32.mrb[0].mxu0
    %1237 = vmatprep.mubr.bf16.mxu0 0
    %1238 = vmatmul.mubr.bf16.gmra.mrb[0].mxu0 %v563
    %v1239 = vpop.f32.mrb[0].mxu0
    %v1240 = vadd.f32 %v1079, %v1239
    %v1241 = vpop.f32.mrb[0].mxu0
    %v1242 = vpop.f32.mrb[0].mxu0
    %v1243 = vadd.f32 %v1082, %v1242
    %v1244 = vpop.f32.mrb[0].mxu0
    %1245 = vmatprep.mubr.bf16.mxu0 0
    %1246 = vmatmul.mubr.bf16.gmra.mrb[0].mxu0 %v566
    %v1247 = vpop.f32.mrb[0].mxu0
    %v1248 = vadd.f32 %v1087, %v1247
    %v1249 = vpop.f32.mrb[0].mxu0
    %v1250 = vpop.f32.mrb[0].mxu0
    %v1251 = vadd.f32 %v1090, %v1250
    %v1252 = vpop.f32.mrb[0].mxu0
    %1253 = vmatprep.mubr.bf16.mxu0 0
    %1254 = vmatmul.mubr.bf16.gmra.mrb[0].mxu0 %v569
    %v1255 = vpop.f32.mrb[0].mxu0
    %v1256 = vadd.f32 %v1095, %v1255
    %v1257 = vpop.f32.mrb[0].mxu0
    %v1258 = vpop.f32.mrb[0].mxu0
    %v1259 = vadd.f32 %v1098, %v1258
    %v1260 = vpop.f32.mrb[0].mxu0
    %1261 = vmatprep.mubr.bf16.mxu0 0
    %1262 = vmatmul.mubr.bf16.gmra.mrb[0].mxu0 %v572
    %v1263 = vpop.f32.mrb[0].mxu0
    %v1264 = vadd.f32 %v1103, %v1263
    %v1265 = vpop.f32.mrb[0].mxu0
    %v1266 = vpop.f32.mrb[0].mxu0
    %v1267 = vadd.f32 %v1106, %v1266
    %v1268 = vpop.f32.mrb[0].mxu0
    %1269 = vmatprep.mubr.bf16.mxu0 0
    %1270 = vmatmul.mubr.bf16.gmra.mrb[0].mxu0 %v575
    %v1271 = vpop.f32.mrb[0].mxu0
    %v1272 = vadd.f32 %v1111, %v1271
    %v1273 = vpop.f32.mrb[0].mxu0
    %v1274 = vpop.f32.mrb[0].mxu0
    %v1275 = vadd.f32 %v1114, %v1274
    %v1276 = vpop.f32.mrb[0].mxu0
    %1277 = vmatprep.mubr.bf16.mxu0 0
    %1278 = vmatmul.mubr.bf16.gmra.mrb[0].mxu0 %v578
    %v1279 = vpop.f32.mrb[0].mxu0
    %v1280 = vadd.f32 %v1119, %v1279
    %v1281 = vpop.f32.mrb[0].mxu0
    %v1282 = vpop.f32.mrb[0].mxu0
    %v1283 = vadd.f32 %v1122, %v1282
    %v1284 = vpop.f32.mrb[0].mxu0
    %1285 = vmatprep.mubr.bf16.mxu0 0
    %1286 = vmatmul.mubr.bf16.gmra.mrb[0].mxu0 %v581
    %v1287 = vpop.f32.mrb[0].mxu0
    %v1288 = vadd.f32 %v1127, %v1287
    %v1289 = vpop.f32.mrb[0].mxu0
    %v1290 = vpop.f32.mrb[0].mxu0
    %v1291 = vadd.f32 %v1130, %v1290
    %v1292 = vpop.f32.mrb[0].mxu0
    %1293 = vmatprep.mubr.bf16.mxu0 0
    %1294 = vmatmul.mubr.bf16.gmra.mrb[0].mxu0 %v584
    %v1295 = vpop.f32.mrb[0].mxu0
    %v1296 = vadd.f32 %v1135, %v1295
    %v1297 = vpop.f32.mrb[0].mxu0
    %v1298 = vpop.f32.mrb[0].mxu0
    %v1299 = vadd.f32 %v1138, %v1298
    %v1300 = vpop.f32.mrb[0].mxu0
    %1301 = vmatprep.mubr.bf16.mxu0 0
    %1302 = vmatmul.mubr.bf16.gmra.mrb[0].mxu0 %v587
    %v1303 = vpop.f32.mrb[0].mxu0
    %v1304 = vadd.f32 %v1143, %v1303
    %v1305 = vpop.f32.mrb[0].mxu0
    %v1306 = vpop.f32.mrb[0].mxu0
    %v1307 = vadd.f32 %v1146, %v1306
    %v1308 = vpop.f32.mrb[0].mxu0
    %1309 = vmatprep.mubr.bf16.mxu0 0
    %1310 = vmatmul.mubr.bf16.gmra.mrb[0].mxu0 %v590
    %v1311 = vpop.f32.mrb[0].mxu0
    %v1312 = vadd.f32 %v1151, %v1311
    %v1313 = vpop.f32.mrb[0].mxu0
    %v1314 = vpop.f32.mrb[0].mxu0
    %v1315 = vadd.f32 %v1154, %v1314
    %v1316 = vpop.f32.mrb[0].mxu0
    %1317 = vmatprep.mubr.bf16.mxu0 0
    %1318 = vmatmul.mubr.bf16.gmra.mrb[0].mxu0 %v593
    %v1319 = vpop.f32.mrb[0].mxu0
    %v1320 = vadd.f32 %v1159, %v1319
    %v1321 = vpop.f32.mrb[0].mxu0
    %v1322 = vpop.f32.mrb[0].mxu0
    %v1323 = vadd.f32 %v1162, %v1322
    %v1324 = vpop.f32.mrb[0].mxu0
    %1325 = vmatprep.mubr.bf16.mxu0 0
    %1326 = vmatmul.mubr.bf16.gmra.mrb[0].mxu0 %v596
    %v1327 = vpop.f32.mrb[0].mxu0
    %v1328 = vadd.f32 %v1167, %v1327
    %v1329 = vpop.f32.mrb[0].mxu0
    %v1330 = vpop.f32.mrb[0].mxu0
    %v1331 = vadd.f32 %v1170, %v1330
    %v1332 = vpop.f32.mrb[0].mxu0
    %1333 = vmatprep.mubr.bf16.mxu0 0
    %1334 = vmatmul.mubr.bf16.gmra.mrb[0].mxu0 %v599
    %v1335 = vpop.f32.mrb[0].mxu0
    %v1336 = vadd.f32 %v1175, %v1335
    %v1337 = vpop.f32.mrb[0].mxu0
    %v1338 = vpop.f32.mrb[0].mxu0
    %v1339 = vadd.f32 %v1178, %v1338
    %v1340 = vpop.f32.mrb[0].mxu0
    %1341 = vmatprep.mubr.bf16.mxu0 0
    %1342 = vmatmul.mubr.bf16.gmra.mrb[0].mxu0 %v602
    %v1343 = vpop.f32.mrb[0].mxu0
    %v1344 = vadd.f32 %v1183, %v1343
    %v1345 = vpop.f32.mrb[0].mxu0
    %v1346 = vpop.f32.mrb[0].mxu0
    %v1347 = vadd.f32 %v1186, %v1346
    %v1348 = vpop.f32.mrb[0].mxu0
    %1349 = vdwg.mxu0
    %v1350 = vmax.f32 %v1224, 0.0
    %v1351 = vmax.f32 %v1227, 0.0
    %v1352 = vmax.f32 %v1232, 0.0
    %v1353 = vmax.f32 %v1235, 0.0
    %v1354 = vmax.f32 %v1240, 0.0
    %v1355 = vmax.f32 %v1243, 0.0
    %v1356 = vmax.f32 %v1248, 0.0
    %v1357 = vmax.f32 %v1251, 0.0
    %v1358 = vmax.f32 %v1256, 0.0
    %v1359 = vmax.f32 %v1259, 0.0
    %v1360 = vmax.f32 %v1264, 0.0
    %v1361 = vmax.f32 %v1267, 0.0
    %v1362 = vmax.f32 %v1272, 0.0
    %v1363 = vmax.f32 %v1275, 0.0
    %v1364 = vmax.f32 %v1280, 0.0
    %v1365 = vmax.f32 %v1283, 0.0
    %v1366 = vmax.f32 %v1288, 0.0
    %v1367 = vmax.f32 %v1291, 0.0
    %v1368 = vmax.f32 %v1296, 0.0
    %v1369 = vmax.f32 %v1299, 0.0
    %v1370 = vmax.f32 %v1304, 0.0
    %v1371 = vmax.f32 %v1307, 0.0
    %v1372 = vmax.f32 %v1312, 0.0
    %v1373 = vmax.f32 %v1315, 0.0
    %v1374 = vmax.f32 %v1320, 0.0
    %v1375 = vmax.f32 %v1323, 0.0
    %v1376 = vmax.f32 %v1328, 0.0
    %v1377 = vmax.f32 %v1331, 0.0
    %v1378 = vmax.f32 %v1336, 0.0
    %v1379 = vmax.f32 %v1339, 0.0
    %v1380 = vmax.f32 %v1344, 0.0
    %v1381 = vmax.f32 %v1347, 0.0
    %v1382 = vmin.f32 %v1350, 2.0
    %v1383 = vmin.f32 %v1351, 2.0
    %v1384 = vmin.f32 %v1352, 2.0
    %v1385 = vmin.f32 %v1353, 2.0
    %v1386 = vmin.f32 %v1354, 2.0
    %v1387 = vmin.f32 %v1355, 2.0
    %v1388 = vmin.f32 %v1356, 2.0
    %v1389 = vmin.f32 %v1357, 2.0
    %v1390 = vmin.f32 %v1358, 2.0
    %v1391 = vmin.f32 %v1359, 2.0
    %v1392 = vmin.f32 %v1360, 2.0
    %v1393 = vmin.f32 %v1361, 2.0
    %v1394 = vmin.f32 %v1362, 2.0
    %v1395 = vmin.f32 %v1363, 2.0
    %v1396 = vmin.f32 %v1364, 2.0
    %v1397 = vmin.f32 %v1365, 2.0
    %v1398 = vmin.f32 %v1366, 2.0
    %v1399 = vmin.f32 %v1367, 2.0
    %v1400 = vmin.f32 %v1368, 2.0
    %v1401 = vmin.f32 %v1369, 2.0
    %v1402 = vmin.f32 %v1370, 2.0
    %v1403 = vmin.f32 %v1371, 2.0
    %v1404 = vmin.f32 %v1372, 2.0
    %v1405 = vmin.f32 %v1373, 2.0
    %v1406 = vmin.f32 %v1374, 2.0
    %v1407 = vmin.f32 %v1375, 2.0
    %v1408 = vmin.f32 %v1376, 2.0
    %v1409 = vmin.f32 %v1377, 2.0
    %v1410 = vmin.f32 %v1378, 2.0
    %v1411 = vmin.f32 %v1379, 2.0
    %v1412 = vmin.f32 %v1380, 2.0
    %v1413 = vmin.f32 %v1381, 2.0
    %v1414 = vstv %s79
    %v1415 = vsub.f32 %v1382, %v1414
    %v1416 = vsub.f32 %v1383, %v1414
    %v1417 = vsub.f32 %v1384, %v1414
    %v1418 = vsub.f32 %v1385, %v1414
    %v1419 = vsub.f32 %v1386, %v1414
    %v1420 = vsub.f32 %v1387, %v1414
    %v1421 = vsub.f32 %v1388, %v1414
    %v1422 = vsub.f32 %v1389, %v1414
    %v1423 = vsub.f32 %v1390, %v1414
    %v1424 = vsub.f32 %v1391, %v1414
    %v1425 = vsub.f32 %v1392, %v1414
    %v1426 = vsub.f32 %v1393, %v1414
    %v1427 = vsub.f32 %v1394, %v1414
    %v1428 = vsub.f32 %v1395, %v1414
    %v1429 = vsub.f32 %v1396, %v1414
    %v1430 = vsub.f32 %v1397, %v1414
    %v1431 = vsub.f32 %v1398, %v1414
    %v1432 = vsub.f32 %v1399, %v1414
    %v1433 = vsub.f32 %v1400, %v1414
    %v1434 = vsub.f32 %v1401, %v1414
    %v1435 = vsub.f32 %v1402, %v1414
    %v1436 = vsub.f32 %v1403, %v1414
    %v1437 = vsub.f32 %v1404, %v1414
    %v1438 = vsub.f32 %v1405, %v1414
    %v1439 = vsub.f32 %v1406, %v1414
    %v1440 = vsub.f32 %v1407, %v1414
    %v1441 = vsub.f32 %v1408, %v1414
    %v1442 = vsub.f32 %v1409, %v1414
    %v1443 = vsub.f32 %v1410, %v1414
    %v1444 = vsub.f32 %v1411, %v1414
    %v1445 = vsub.f32 %v1412, %v1414
    %v1446 = vsub.f32 %v1413, %v1414
    %v1447 = vstv %s81
    %v1448 = vmul.f32 %v1447, %v1382
    %v1449 = vmul.f32 %v1447, %v1383
    %v1450 = vmul.f32 %v1447, %v1384
    %v1451 = vmul.f32 %v1447, %v1385
    %v1452 = vmul.f32 %v1447, %v1386
    %v1453 = vmul.f32 %v1447, %v1387
    %v1454 = vmul.f32 %v1447, %v1388
    %v1455 = vmul.f32 %v1447, %v1389
    %v1456 = vmul.f32 %v1447, %v1390
    %v1457 = vmul.f32 %v1447, %v1391
    %v1458 = vmul.f32 %v1447, %v1392
    %v1459 = vmul.f32 %v1447, %v1393
    %v1460 = vmul.f32 %v1447, %v1394
    %v1461 = vmul.f32 %v1447, %v1395
    %v1462 = vmul.f32 %v1447, %v1396
    %v1463 = vmul.f32 %v1447, %v1397
    %v1464 = vmul.f32 %v1447, %v1398
    %v1465 = vmul.f32 %v1447, %v1399
    %v1466 = vmul.f32 %v1447, %v1400
    %v1467 = vmul.f32 %v1447, %v1401
    %v1468 = vmul.f32 %v1447, %v1402
    %v1469 = vmul.f32 %v1447, %v1403
    %v1470 = vmul.f32 %v1447, %v1404
    %v1471 = vmul.f32 %v1447, %v1405
    %v1472 = vmul.f32 %v1447, %v1406
    %v1473 = vmul.f32 %v1447, %v1407
    %v1474 = vmul.f32 %v1447, %v1408
    %v1475 = vmul.f32 %v1447, %v1409
    %v1476 = vmul.f32 %v1447, %v1410
    %v1477 = vmul.f32 %v1447, %v1411
    %v1478 = vmul.f32 %v1447, %v1412
    %v1479 = vmul.f32 %v1447, %v1413
    %v1480 = vstv %s80
    %v1481 = vsub.f32 %v1480, %v1448
    %v1482 = vsub.f32 %v1480, %v1449
    %v1483 = vsub.f32 %v1480, %v1450
    %v1484 = vsub.f32 %v1480, %v1451
    %v1485 = vsub.f32 %v1480, %v1452
    %v1486 = vsub.f32 %v1480, %v1453
    %v1487 = vsub.f32 %v1480, %v1454
    %v1488 = vsub.f32 %v1480, %v1455
    %v1489 = vsub.f32 %v1480, %v1456
    %v1490 = vsub.f32 %v1480, %v1457
    %v1491 = vsub.f32 %v1480, %v1458
    %v1492 = vsub.f32 %v1480, %v1459
    %v1493 = vsub.f32 %v1480, %v1460
    %v1494 = vsub.f32 %v1480, %v1461
    %v1495 = vsub.f32 %v1480, %v1462
    %v1496 = vsub.f32 %v1480, %v1463
    %v1497 = vsub.f32 %v1480, %v1464
    %v1498 = vsub.f32 %v1480, %v1465
    %v1499 = vsub.f32 %v1480, %v1466
    %v1500 = vsub.f32 %v1480, %v1467
    %v1501 = vsub.f32 %v1480, %v1468
    %v1502 = vsub.f32 %v1480, %v1469
    %v1503 = vsub.f32 %v1480, %v1470
    %v1504 = vsub.f32 %v1480, %v1471
    %v1505 = vsub.f32 %v1480, %v1472
    %v1506 = vsub.f32 %v1480, %v1473
    %v1507 = vsub.f32 %v1480, %v1474
    %v1508 = vsub.f32 %v1480, %v1475
    %v1509 = vsub.f32 %v1480, %v1476
    %v1510 = vsub.f32 %v1480, %v1477
    %v1511 = vsub.f32 %v1480, %v1478
    %v1512 = vsub.f32 %v1480, %v1479
    %v1513 = vand.u32 2147483647, %v1415
    %v1514 = vand.u32 2147483647, %v1416
    %v1515 = vand.u32 2147483647, %v1417
    %v1516 = vand.u32 2147483647, %v1418
    %v1517 = vand.u32 2147483647, %v1419
    %v1518 = vand.u32 2147483647, %v1420
    %v1519 = vand.u32 2147483647, %v1421
    %v1520 = vand.u32 2147483647, %v1422
    %v1521 = vand.u32 2147483647, %v1423
    %v1522 = vand.u32 2147483647, %v1424
    %v1523 = vand.u32 2147483647, %v1425
    %v1524 = vand.u32 2147483647, %v1426
    %v1525 = vand.u32 2147483647, %v1427
    %v1526 = vand.u32 2147483647, %v1428
    %v1527 = vand.u32 2147483647, %v1429
    %v1528 = vand.u32 2147483647, %v1430
    %v1529 = vand.u32 2147483647, %v1431
    %v1530 = vand.u32 2147483647, %v1432
    %v1531 = vand.u32 2147483647, %v1433
    %v1532 = vand.u32 2147483647, %v1434
    %v1533 = vand.u32 2147483647, %v1435
    %v1534 = vand.u32 2147483647, %v1436
    %v1535 = vand.u32 2147483647, %v1437
    %v1536 = vand.u32 2147483647, %v1438
    %v1537 = vand.u32 2147483647, %v1439
    %v1538 = vand.u32 2147483647, %v1440
    %v1539 = vand.u32 2147483647, %v1441
    %v1540 = vand.u32 2147483647, %v1442
    %v1541 = vand.u32 2147483647, %v1443
    %v1542 = vand.u32 2147483647, %v1444
    %v1543 = vand.u32 2147483647, %v1445
    %v1544 = vand.u32 2147483647, %v1446
    %v1545 = vstv %s82
    %v1546 = vmul.f32 %v1545, %v1513
    %v1547 = vmul.f32 %v1545, %v1514
    %v1548 = vmul.f32 %v1545, %v1515
    %v1549 = vmul.f32 %v1545, %v1516
    %v1550 = vmul.f32 %v1545, %v1517
    %v1551 = vmul.f32 %v1545, %v1518
    %v1552 = vmul.f32 %v1545, %v1519
    %v1553 = vmul.f32 %v1545, %v1520
    %v1554 = vmul.f32 %v1545, %v1521
    %v1555 = vmul.f32 %v1545, %v1522
    %v1556 = vmul.f32 %v1545, %v1523
    %v1557 = vmul.f32 %v1545, %v1524
    %v1558 = vmul.f32 %v1545, %v1525
    %v1559 = vmul.f32 %v1545, %v1526
    %v1560 = vmul.f32 %v1545, %v1527
    %v1561 = vmul.f32 %v1545, %v1528
    %v1562 = vmul.f32 %v1545, %v1529
    %v1563 = vmul.f32 %v1545, %v1530
    %v1564 = vmul.f32 %v1545, %v1531
    %v1565 = vmul.f32 %v1545, %v1532
    %v1566 = vmul.f32 %v1545, %v1533
    %v1567 = vmul.f32 %v1545, %v1534
    %v1568 = vmul.f32 %v1545, %v1535
    %v1569 = vmul.f32 %v1545, %v1536
    %v1570 = vmul.f32 %v1545, %v1537
    %v1571 = vmul.f32 %v1545, %v1538
    %v1572 = vmul.f32 %v1545, %v1539
    %v1573 = vmul.f32 %v1545, %v1540
    %v1574 = vmul.f32 %v1545, %v1541
    %v1575 = vmul.f32 %v1545, %v1542
    %v1576 = vmul.f32 %v1545, %v1543
    %v1577 = vmul.f32 %v1545, %v1544
    %v1578 = vadd.f32 %v1481, %v1546
    %v1579 = vadd.f32 %v1482, %v1547
    %v1580 = vadd.f32 %v1483, %v1548
    %v1581 = vadd.f32 %v1484, %v1549
    %v1582 = vadd.f32 %v1485, %v1550
    %v1583 = vadd.f32 %v1486, %v1551
    %v1584 = vadd.f32 %v1487, %v1552
    %v1585 = vadd.f32 %v1488, %v1553
    %v1586 = vadd.f32 %v1489, %v1554
    %v1587 = vadd.f32 %v1490, %v1555
    %v1588 = vadd.f32 %v1491, %v1556
    %v1589 = vadd.f32 %v1492, %v1557
    %v1590 = vadd.f32 %v1493, %v1558
    %v1591 = vadd.f32 %v1494, %v1559
    %v1592 = vadd.f32 %v1495, %v1560
    %v1593 = vadd.f32 %v1496, %v1561
    %v1594 = vadd.f32 %v1497, %v1562
    %v1595 = vadd.f32 %v1498, %v1563
    %v1596 = vadd.f32 %v1499, %v1564
    %v1597 = vadd.f32 %v1500, %v1565
    %v1598 = vadd.f32 %v1501, %v1566
    %v1599 = vadd.f32 %v1502, %v1567
    %v1600 = vadd.f32 %v1503, %v1568
    %v1601 = vadd.f32 %v1504, %v1569
    %v1602 = vadd.f32 %v1505, %v1570
    %v1603 = vadd.f32 %v1506, %v1571
    %v1604 = vadd.f32 %v1507, %v1572
    %v1605 = vadd.f32 %v1508, %v1573
    %v1606 = vadd.f32 %v1509, %v1574
    %v1607 = vadd.f32 %v1510, %v1575
    %v1608 = vadd.f32 %v1511, %v1576
    %v1609 = vadd.f32 %v1512, %v1577
    %v1610 = vrcp.pop %v1578
    %v1611 = vrcp.pop %v1579
    %v1612 = vrcp.pop %v1580
    %v1613 = vrcp.pop %v1581
    %v1614 = vrcp.pop %v1582
    %v1615 = vrcp.pop %v1583
    %v1616 = vrcp.pop %v1584
    %v1617 = vrcp.pop %v1585
    %v1618 = vrcp.pop %v1586
    %v1619 = vrcp.pop %v1587
    %v1620 = vrcp.pop %v1588
    %v1621 = vrcp.pop %v1589
    %v1622 = vrcp.pop %v1590
    %v1623 = vrcp.pop %v1591
    %v1624 = vrcp.pop %v1592
    %v1625 = vrcp.pop %v1593
    %v1626 = vrcp.pop %v1594
    %v1627 = vrcp.pop %v1595
    %v1628 = vrcp.pop %v1596
    %v1629 = vrcp.pop %v1597
    %v1630 = vrcp.pop %v1598
    %v1631 = vrcp.pop %v1599
    %v1632 = vrcp.pop %v1600
    %v1633 = vrcp.pop %v1601
    %v1634 = vrcp.pop %v1602
    %v1635 = vrcp.pop %v1603
    %v1636 = vrcp.pop %v1604
    %v1637 = vrcp.pop %v1605
    %v1638 = vrcp.pop %v1606
    %v1639 = vrcp.pop %v1607
    %v1640 = vrcp.pop %v1608
    %v1641 = vrcp.pop %v1609
    %v1642 = vmul.f32 %v1578, %v1610
    %v1643 = vmul.f32 %v1579, %v1611
    %v1644 = vmul.f32 %v1580, %v1612
    %v1645 = vmul.f32 %v1581, %v1613
    %v1646 = vmul.f32 %v1582, %v1614
    %v1647 = vmul.f32 %v1583, %v1615
    %v1648 = vmul.f32 %v1584, %v1616
    %v1649 = vmul.f32 %v1585, %v1617
    %v1650 = vmul.f32 %v1586, %v1618
    %v1651 = vmul.f32 %v1587, %v1619
    %v1652 = vmul.f32 %v1588, %v1620
    %v1653 = vmul.f32 %v1589, %v1621
    %v1654 = vmul.f32 %v1590, %v1622
    %v1655 = vmul.f32 %v1591, %v1623
    %v1656 = vmul.f32 %v1592, %v1624
    %v1657 = vmul.f32 %v1593, %v1625
    %v1658 = vmul.f32 %v1594, %v1626
    %v1659 = vmul.f32 %v1595, %v1627
    %v1660 = vmul.f32 %v1596, %v1628
    %v1661 = vmul.f32 %v1597, %v1629
    %v1662 = vmul.f32 %v1598, %v1630
    %v1663 = vmul.f32 %v1599, %v1631
    %v1664 = vmul.f32 %v1600, %v1632
    %v1665 = vmul.f32 %v1601, %v1633
    %v1666 = vmul.f32 %v1602, %v1634
    %v1667 = vmul.f32 %v1603, %v1635
    %v1668 = vmul.f32 %v1604, %v1636
    %v1669 = vmul.f32 %v1605, %v1637
    %v1670 = vmul.f32 %v1606, %v1638
    %v1671 = vmul.f32 %v1607, %v1639
    %v1672 = vmul.f32 %v1608, %v1640
    %v1673 = vmul.f32 %v1609, %v1641
    %v1674 = vsub.f32 2.0, %v1642
    %v1675 = vsub.f32 2.0, %v1643
    %v1676 = vsub.f32 2.0, %v1644
    %v1677 = vsub.f32 2.0, %v1645
    %v1678 = vsub.f32 2.0, %v1646
    %v1679 = vsub.f32 2.0, %v1647
    %v1680 = vsub.f32 2.0, %v1648
    %v1681 = vsub.f32 2.0, %v1649
    %v1682 = vsub.f32 2.0, %v1650
    %v1683 = vsub.f32 2.0, %v1651
    %v1684 = vsub.f32 2.0, %v1652
    %v1685 = vsub.f32 2.0, %v1653
    %v1686 = vsub.f32 2.0, %v1654
    %v1687 = vsub.f32 2.0, %v1655
    %v1688 = vsub.f32 2.0, %v1656
    %v1689 = vsub.f32 2.0, %v1657
    %v1690 = vsub.f32 2.0, %v1658
    %v1691 = vsub.f32 2.0, %v1659
    %v1692 = vsub.f32 2.0, %v1660
    %v1693 = vsub.f32 2.0, %v1661
    %v1694 = vsub.f32 2.0, %v1662
    %v1695 = vsub.f32 2.0, %v1663
    %v1696 = vsub.f32 2.0, %v1664
    %v1697 = vsub.f32 2.0, %v1665
    %v1698 = vsub.f32 2.0, %v1666
    %v1699 = vsub.f32 2.0, %v1667
    %v1700 = vsub.f32 2.0, %v1668
    %v1701 = vsub.f32 2.0, %v1669
    %v1702 = vsub.f32 2.0, %v1670
    %v1703 = vsub.f32 2.0, %v1671
    %v1704 = vsub.f32 2.0, %v1672
    %v1705 = vsub.f32 2.0, %v1673
    %v1706 = vmul.f32 %v1610, %v1674
    %v1707 = vmul.f32 %v1611, %v1675
    %v1708 = vmul.f32 %v1612, %v1676
    %v1709 = vmul.f32 %v1613, %v1677
    %v1710 = vmul.f32 %v1614, %v1678
    %v1711 = vmul.f32 %v1615, %v1679
    %v1712 = vmul.f32 %v1616, %v1680
    %v1713 = vmul.f32 %v1617, %v1681
    %v1714 = vmul.f32 %v1618, %v1682
    %v1715 = vmul.f32 %v1619, %v1683
    %v1716 = vmul.f32 %v1620, %v1684
    %v1717 = vmul.f32 %v1621, %v1685
    %v1718 = vmul.f32 %v1622, %v1686
    %v1719 = vmul.f32 %v1623, %v1687
    %v1720 = vmul.f32 %v1624, %v1688
    %v1721 = vmul.f32 %v1625, %v1689
    %v1722 = vmul.f32 %v1626, %v1690
    %v1723 = vmul.f32 %v1627, %v1691
    %v1724 = vmul.f32 %v1628, %v1692
    %v1725 = vmul.f32 %v1629, %v1693
    %v1726 = vmul.f32 %v1630, %v1694
    %v1727 = vmul.f32 %v1631, %v1695
    %v1728 = vmul.f32 %v1632, %v1696
    %v1729 = vmul.f32 %v1633, %v1697
    %v1730 = vmul.f32 %v1634, %v1698
    %v1731 = vmul.f32 %v1635, %v1699
    %v1732 = vmul.f32 %v1636, %v1700
    %v1733 = vmul.f32 %v1637, %v1701
    %v1734 = vmul.f32 %v1638, %v1702
    %v1735 = vmul.f32 %v1639, %v1703
    %v1736 = vmul.f32 %v1640, %v1704
    %v1737 = vmul.f32 %v1641, %v1705
    %v1738 = vmul.f32 %v1415, %v1706
    %v1739 = vmul.f32 %v1416, %v1707
    %v1740 = vmul.f32 %v1417, %v1708
    %v1741 = vmul.f32 %v1418, %v1709
    %v1742 = vmul.f32 %v1419, %v1710
    %v1743 = vmul.f32 %v1420, %v1711
    %v1744 = vmul.f32 %v1421, %v1712
    %v1745 = vmul.f32 %v1422, %v1713
    %v1746 = vmul.f32 %v1423, %v1714
    %v1747 = vmul.f32 %v1424, %v1715
    %v1748 = vmul.f32 %v1425, %v1716
    %v1749 = vmul.f32 %v1426, %v1717
    %v1750 = vmul.f32 %v1427, %v1718
    %v1751 = vmul.f32 %v1428, %v1719
    %v1752 = vmul.f32 %v1429, %v1720
    %v1753 = vmul.f32 %v1430, %v1721
    %v1754 = vmul.f32 %v1431, %v1722
    %v1755 = vmul.f32 %v1432, %v1723
    %v1756 = vmul.f32 %v1433, %v1724
    %v1757 = vmul.f32 %v1434, %v1725
    %v1758 = vmul.f32 %v1435, %v1726
    %v1759 = vmul.f32 %v1436, %v1727
    %v1760 = vmul.f32 %v1437, %v1728
    %v1761 = vmul.f32 %v1438, %v1729
    %v1762 = vmul.f32 %v1439, %v1730
    %v1763 = vmul.f32 %v1440, %v1731
    %v1764 = vmul.f32 %v1441, %v1732
    %v1765 = vmul.f32 %v1442, %v1733
    %v1766 = vmul.f32 %v1443, %v1734
    %v1767 = vmul.f32 %v1444, %v1735
    %v1768 = vmul.f32 %v1445, %v1736
    %v1769 = vmul.f32 %v1446, %v1737
    %v1770 = vld [vmem:[#allocation2] sm:$0x1]
    %v1771 = vld [vmem:[%s4] sm:$0x3]
    %v1773 = vlaneseq
    %v1774 = vshrl.u32 %v1773, 7
    %v1775 = vsub.s32 0, %v1774
    %v1776 = vrot.slane %v1771, %v1775
    %v1777 = vlaneseq
    %v1778 = vshrl.u32 %v1777, 7
    %v1779 = vsub.s32 1, %v1778
    %v1780 = vrot.slane %v1771, %v1779
    %1783 = vmatprep.subr.mxu0 0.0
    %1784 = vmatpush1.msra.mxu0 %v1738
    %1785 = vmatprep.subr.mxu0 0.0
    %1786 = vmatpush1.msra.mxu0 %v1739
    %1787 = vmatprep.subr.mxu0 0.0
    %1788 = vmatpush1.msra.mxu0 %v1740
    %1789 = vmatprep.subr.mxu0 0.0
    %1790 = vmatpush1.msra.mxu0 %v1741
    %1791 = vmatprep.subr.mxu0 0.0
    %1792 = vmatpush1.msra.mxu0 %v1742
    %1793 = vmatprep.subr.mxu0 0.0
    %1794 = vmatpush1.msra.mxu0 %v1743
    %1795 = vmatprep.subr.mxu0 0.0
    %1796 = vmatpush1.msra.mxu0 %v1744
    %1797 = vmatprep.subr.mxu0 0.0
    %1798 = vmatpush1.msra.mxu0 %v1745
    %1799 = vmatprep.subr.mxu0 0.0
    %1800 = vmatpush1.msra.mxu0 %v1746
    %1801 = vmatprep.subr.mxu0 0.0
    %1802 = vmatpush1.msra.mxu0 %v1747
    %1803 = vmatprep.subr.mxu0 0.0
    %1804 = vmatpush1.msra.mxu0 %v1748
    %1805 = vmatprep.subr.mxu0 0.0
    %1806 = vmatpush1.msra.mxu0 %v1749
    %1807 = vmatprep.subr.mxu0 0.0
    %1808 = vmatpush1.msra.mxu0 %v1750
    %1809 = vmatprep.subr.mxu0 0.0
    %1810 = vmatpush1.msra.mxu0 %v1751
    %1811 = vmatprep.subr.mxu0 0.0
    %1812 = vmatpush1.msra.mxu0 %v1752
    %1813 = vmatprep.subr.mxu0 0.0
    %1814 = vmatpush1.msra.mxu0 %v1753
    %1815 = vmatprep.subr.mxu0 0.0
    %1816 = vmatpush1.msra.mxu0 %v1754
    %1817 = vmatprep.subr.mxu0 0.0
    %1818 = vmatpush1.msra.mxu0 %v1755
    %1819 = vmatprep.subr.mxu0 0.0
    %1820 = vmatpush1.msra.mxu0 %v1756
    %1821 = vmatprep.subr.mxu0 0.0
    %1822 = vmatpush1.msra.mxu0 %v1757
    %1823 = vmatprep.subr.mxu0 0.0
    %1824 = vmatpush1.msra.mxu0 %v1758
    %1825 = vmatprep.subr.mxu0 0.0
    %1826 = vmatpush1.msra.mxu0 %v1759
    %1827 = vmatprep.subr.mxu0 0.0
    %1828 = vmatpush1.msra.mxu0 %v1760
    %1829 = vmatprep.subr.mxu0 0.0
    %1830 = vmatpush1.msra.mxu0 %v1761
    %1831 = vmatprep.subr.mxu0 0.0
    %1832 = vmatpush1.msra.mxu0 %v1762
    %1833 = vmatprep.subr.mxu0 0.0
    %1834 = vmatpush1.msra.mxu0 %v1763
    %1835 = vmatprep.subr.mxu0 0.0
    %1836 = vmatpush1.msra.mxu0 %v1764
    %1837 = vmatprep.subr.mxu0 0.0
    %1838 = vmatpush1.msra.mxu0 %v1765
    %1839 = vmatprep.subr.mxu0 0.0
    %1840 = vmatpush1.msra.mxu0 %v1766
    %1841 = vmatprep.subr.mxu0 0.0
    %1842 = vmatpush1.msra.mxu0 %v1767
    %1843 = vmatprep.subr.mxu0 0.0
    %1844 = vmatpush1.msra.mxu0 %v1768
    %1845 = vmatprep.subr.mxu0 0.0
    %1846 = vmatpush1.msra.mxu0 %v1769
    %1847 = vmatprep.mubr.f32.mxu0 %v1780
    %1848 = vmatmul.mubr.f32.gmra.mrb[0].mxu0 %v1776
    %v1849 = vpop.f32.mrb[0].mxu0
    %v1850 = vadd.f32 0.0, %v1849
    %v1851 = vpop.f32.mrb[0].mxu0
    %1852 = vdwg.mxu0
    %v1853 = vadd.f32 %v1770, %v1850
    %1854 = vst [vmem:[#allocation2] sm:$0x1] %v1853
    // Predicated region
    $region42: #{tpu_custom_call.1} parent=1 // pred_check
      %p1855 = pneg %p74
    $region43: #{tpu_custom_call.1} parent=1 // pred_check_branch
      %1857 = sbr.rel (%p1855) target = $region45
    $region44: #{tpu_custom_call.1} parent=1 // pred_region
      %v1858 = vld [vmem:[#allocation2] sm:$0x1]
      %v1859 = vstv %s83
      %v1860 = vmul.f32 %v1859, %v1858
      %v1861 = vstv %s84
      %v1862 = vadd.f32 %v1860, %v1861
      %1863 = vst [vmem:[#allocation11] sm:$0x1] %v1862
    $region45: #{tpu_custom_call.1} parent=1 // pred_fallthru
      _
    // Predicated region
    $region46: #{tpu_custom_call.1} parent=1 // pred_check
      _
    $region47: #{tpu_custom_call.1} parent=1 // pred_check_branch
      %1865 = sbr.rel (0) target = $region49
    $region48: #{tpu_custom_call.1} parent=1 // pred_region
      %s1867 = ssub.s32 16, 16
      %1868 = vsyncadd [#allocation5], %s1867
      %s1870 = sshll.u32 [#allocation11], 4
      %s1871 = int_to_ptr.vmem [resolvable:$true] %s1870
      %1873 = dma.vmem_to_hbm [thread:$0]  %s1871, 16, %s5, [#allocation5]
    $region49: #{tpu_custom_call.1} parent=1 // pred_fallthru
      _
    // Predicated region
    $region50: #{tpu_custom_call.1} parent=1 // pred_check
      _
    $region51: #{tpu_custom_call.1} parent=1 // pred_check_branch
      %1875 = sbr.rel (0) target = $region53
    $region52: #{tpu_custom_call.1} parent=1 // pred_region
      %1876 = dma.done [#allocation5], 16
    $region53: #{tpu_custom_call.1} parent=1 // pred_fallthru
      _
    %1877 = vsyncpa [#allocation4], 1
    %1878 = vsyncpa [#allocation9], 1
    %1879 = vsyncpa [#allocation5], 1
    %1880 = vsyncpa [#allocation6], 1

</llo_original>
